<compile_context>
chip_gen: v6e
topology: v6e:2x2x1
jax: 0.10.0
libtpu: 0.0.40
codegen_flags: <defaults>
</compile_context>

<pallas_src>
import math

import jax
import jax.numpy as jnp
from jax.experimental import pallas as pl
from jax.experimental.pallas import tpu as pltpu


# ----------------------------------------------------------------------------
# Fused Pallas kernel: BOTH branches (Linear -> NL-layer LSTM) in one grid-less
# call; the recurrence is a fully unrolled time loop with lane-packed h/c carried
# as register values.
# ----------------------------------------------------------------------------
def make_dynamics_kernel(num_layers, state_dim, seq_len):
    NL, SD, L = num_layers, state_dim, seq_len
    SDf = 2 * SD          # fused (both-branch) state width
    GW = 4 * SDf          # fused gate width (i|f|g|o, each SDf wide)

    def kernel(*refs):
        x_ref, wlin_ref, blin_ref, w0in_ref, whh0_ref, b0_ref = refs[:6]
        n_deep = NL - 1
        deep_refs = refs[6:6 + 2 * n_deep]
        out_ref = refs[6 + 2 * n_deep]

        x = x_ref[...]                                            # (L, S+A)
        # Hoisted, loop-invariant sequence-level work (both branches lane-packed):
        #   Linear for the whole sequence, then layer-0 input->hidden gate
        #   pre-activations for ALL time steps (one matmul each).
        xh = jnp.dot(x, wlin_ref[...],
                     preferred_element_type=jnp.float32) + blin_ref[...]      # (L, 2H)
        gih0 = jnp.dot(xh, w0in_ref[...],
                       preferred_element_type=jnp.float32) + b0_ref[...]      # (L, GW)

        def cell(gates, c_prev):
            # i/f/o pre-activations were host-scaled by 0.5, so a single tanh over
            # the whole gates vreg gives tanh(z/2) for i/f/o and tanh(z) for g:
            #   sigmoid(z) = 0.5 * (1 + tanh(z/2)).
            th = jnp.tanh(gates)
            i_g = 0.5 * th[:, 0 * SDf:1 * SDf] + 0.5
            f_g = 0.5 * th[:, 1 * SDf:2 * SDf] + 0.5
            g_g = th[:, 2 * SDf:3 * SDf]
            o_g = 0.5 * th[:, 3 * SDf:4 * SDf] + 0.5
            c_new = f_g * c_prev + i_g * g_g
            h_new = o_g * jnp.tanh(c_new)
            return h_new, c_new

        # Recurrent state kept in vregs, lane-packed [branch_r | branch_s].
        h = [jnp.zeros((1, SDf), jnp.float32) for _ in range(NL)]
        c = [jnp.zeros((1, SDf), jnp.float32) for _ in range(NL)]

        # Fully unrolled time loop (L is small); maximal scheduler visibility.
        rows = []
        for t in range(L):
            # layer 0: input gates precomputed, one fused recurrent matmul remains
            gates = gih0[t:t + 1, :] + jnp.dot(
                h[0], whh0_ref[...], preferred_element_type=jnp.float32)
            h[0], c[0] = cell(gates, c[0])
            inp = h[0]
            # deeper layers: ih + hh fused into a single matmul per layer
            for li in range(1, NL):
                w_ref = deep_refs[2 * (li - 1)]
                b_ref = deep_refs[2 * (li - 1) + 1]
                lhs = jnp.concatenate([inp, h[li]], axis=-1)       # (1, 2*SDf)
                gates = jnp.dot(lhs, w_ref[...],
                                preferred_element_type=jnp.float32) + b_ref[...]
                h[li], c[li] = cell(gates, c[li])
                inp = h[li]
            rows.append(inp)

        # One batched store of the last layer's hidden states for both branches.
        out_ref[...] = jnp.concatenate(rows, axis=0)               # (L, 2*SD)

    return kernel


# ----------------------------------------------------------------------------
# Host-side weight packing: block-diagonal cross-branch fusion, gate-type-major
# columns, ih+hh row stacking for deeper layers, and 0.5 scaling of i/f/o
# columns/biases (for the single-tanh sigmoid rewrite).
# ----------------------------------------------------------------------------
def pack_fused_params(reward_params, state_params, state_dim):
    SD = state_dim

    def gate_major(wT, pos):
        # wT: (in_dim, 4*SD) with columns [i|f|g|o]; place into (in_dim, 8*SD) with
        # gate-type-major columns [i_r i_s | f_r f_s | g_r g_s | o_r o_s],
        # this branch at position `pos`, zeros elsewhere (block-diagonal).
        blocks = []
        for g in range(4):
            col = wT[:, g * SD:(g + 1) * SD]
            zero = jnp.zeros_like(col)
            blocks.append(col if pos == 0 else zero)
            blocks.append(zero if pos == 0 else col)
        return jnp.concatenate(blocks, axis=1)

    def gate_major_bias(b_r, b_s):
        parts = []
        for g in range(4):
            parts.append(b_r[:, g * SD:(g + 1) * SD])
            parts.append(b_s[:, g * SD:(g + 1) * SD])
        return jnp.concatenate(parts, axis=1)                     # (1, 8*SD)

    # Halve i/f/o pre-activations so sigmoid(z) = 0.5*(1+tanh(z/2)) needs one tanh.
    scale = jnp.concatenate([
        jnp.full((2 * SD,), 0.5, jnp.float32),                    # i
        jnp.full((2 * SD,), 0.5, jnp.float32),                    # f
        jnp.ones((2 * SD,), jnp.float32),                         # g (plain tanh)
        jnp.full((2 * SD,), 0.5, jnp.float32),                    # o
    ])[None, :]

    wlinT_r, blin_r, layers_r = reward_params
    wlinT_s, blin_s, layers_s = state_params

    wlin = jnp.concatenate([wlinT_r, wlinT_s], axis=1)            # (S+A, 2H)
    blin = jnp.concatenate([blin_r, blin_s], axis=1)              # (1, 2H)

    wih0_r, whh0_r, b0_r = layers_r[0]
    wih0_s, whh0_s, b0_s = layers_s[0]
    W0_in = jnp.concatenate([gate_major(wih0_r, 0),
                             gate_major(wih0_s, 1)], axis=0) * scale   # (2H, 8SD)
    Whh0 = jnp.concatenate([gate_major(whh0_r, 0),
                            gate_major(whh0_s, 1)], axis=0) * scale    # (2SD, 8SD)
    b0 = gate_major_bias(b0_r, b0_s) * scale                           # (1, 8SD)

    deep = []
    for l in range(1, len(layers_r)):
        wih_r, whh_r, b_r = layers_r[l]
        wih_s, whh_s, b_s = layers_s[l]
        Wl = jnp.concatenate([gate_major(wih_r, 0), gate_major(wih_s, 1),
                              gate_major(whh_r, 0), gate_major(whh_s, 1)],
                             axis=0) * scale                           # (4SD, 8SD)
        bl = gate_major_bias(b_r, b_s) * scale                         # (1, 8SD)
        deep.append((Wl, bl))

    return (wlin, blin, W0_in, Whh0, b0, deep)


@jax.jit
def dynamics_forward(state_normalized, action, fused):
    # torch.cat([state.T, action.T]).T == concat along the feature axis
    x = jnp.concatenate([state_normalized, action], axis=-1)
    wlin, blin, W0_in, Whh0, b0, deep = fused
    L = x.shape[0]
    SD = Whh0.shape[0] // 2
    NL = 1 + len(deep)

    flat = [x, wlin, blin, W0_in, Whh0, b0]
    for Wl, bl in deep:
        flat.extend([Wl, bl])

    out = pl.pallas_call(
        make_dynamics_kernel(NL, SD, L),
        out_shape=jax.ShapeDtypeStruct((L, 2 * SD), jnp.float32),
        in_specs=[pl.BlockSpec(memory_space=pltpu.MemorySpace.VMEM)] * len(flat),
        out_specs=pl.BlockSpec(memory_space=pltpu.MemorySpace.VMEM),
    )(*flat)
    # lane-packed output: [reward | next_state]
    return out[:, :SD], out[:, SD:]


# ----------------------------------------------------------------------------
# Deterministic parameter init (mimics PyTorch's U(-1/sqrt(fan), 1/sqrt(fan))).
# ----------------------------------------------------------------------------
def init_branch(key, in_dim, hidden, state_dim, num_layers):
    keys = jax.random.split(key, 2 + 4 * num_layers)
    k_lin = 1.0 / math.sqrt(in_dim)
    w_lin = jax.random.uniform(keys[0], (hidden, in_dim), jnp.float32, -k_lin, k_lin)
    b_lin = jax.random.uniform(keys[1], (hidden,), jnp.float32, -k_lin, k_lin)
    layers = []
    for l in range(num_layers):
        in_l = hidden if l == 0 else state_dim
        k = 1.0 / math.sqrt(state_dim)
        kk = keys[2 + 4 * l: 6 + 4 * l]
        w_ih = jax.random.uniform(kk[0], (4 * state_dim, in_l), jnp.float32, -k, k)
        w_hh = jax.random.uniform(kk[1], (4 * state_dim, state_dim), jnp.float32, -k, k)
        b_ih = jax.random.uniform(kk[2], (4 * state_dim,), jnp.float32, -k, k)
        b_hh = jax.random.uniform(kk[3], (4 * state_dim,), jnp.float32, -k, k)
        # Pre-transpose weights and fuse the two biases (mathematically identical).
        layers.append((w_ih.T, w_hh.T, (b_ih + b_hh)[None, :]))
    return (w_lin.T, b_lin[None, :], layers)


# ----------------------------------------------------------------------------
# Pure-JAX reference (same math as PyTorch Linear -> nn.LSTM) for correctness.
# ----------------------------------------------------------------------------
def ref_branch(x, wlinT, blin, layers):
    xh = x @ wlinT + blin
    SD = layers[0][1].shape[0]
    NL = len(layers)
    h0 = jnp.zeros((NL, SD), jnp.float32)
    c0 = jnp.zeros((NL, SD), jnp.float32)

    def step(carry, inp):
        h, c = carry
        new_h, new_c = [], []
        cur = inp
        for l, (wihT, whhT, b) in enumerate(layers):
            gates = cur @ wihT + h[l] @ whhT + b[0]
            i_g = jax.nn.sigmoid(gates[0 * SD:1 * SD])
            f_g = jax.nn.sigmoid(gates[1 * SD:2 * SD])
            g_g = jnp.tanh(gates[2 * SD:3 * SD])
            o_g = jax.nn.sigmoid(gates[3 * SD:4 * SD])
            cc = f_g * c[l] + i_g * g_g
            hh = o_g * jnp.tanh(cc)
            new_h.append(hh)
            new_c.append(cc)
            cur = hh
        return (jnp.stack(new_h), jnp.stack(new_c)), cur

    _, out = jax.lax.scan(step, (h0, c0), xh)
    return out


if __name__ == "__main__":
    state_dim = 32          # state_dimension (== LSTM hidden size)
    action_dim = 8          # action_dimension
    hidden = 32             # hidden_layer_dimensions
    num_layers = 2          # number_of_hidden_layer
    L = 8                   # rows of the 2-D input (unbatched LSTM sequence length)

    key = jax.random.PRNGKey(0)
    k_s, k_a, k_r, k_n = jax.random.split(key, 4)
    state = jax.random.normal(k_s, (L, state_dim), jnp.float32)
    action = jax.random.normal(k_a, (L, action_dim), jnp.float32)

    reward_params = init_branch(k_r, state_dim + action_dim, hidden, state_dim, num_layers)
    state_params = init_branch(k_n, state_dim + action_dim, hidden, state_dim, num_layers)
    fused = pack_fused_params(reward_params, state_params, state_dim)

    reward, next_state = dynamics_forward(state, action, fused)
    jax.block_until_ready((reward, next_state))

    # Verify against the pure-JAX reference.
    x = jnp.concatenate([state, action], axis=-1)
    ref_r = ref_branch(x, *reward_params)
    ref_n = ref_branch(x, *state_params)
    assert reward.shape == (L, state_dim) and next_state.shape == (L, state_dim)
    assert jnp.allclose(reward, ref_r, atol=1e-3, rtol=1e-3)
    assert jnp.allclose(next_state, ref_n, atol=1e-3, rtol=1e-3)

    print("KERNEL_OK")
</pallas_src>

<mosaic_0001>
module attributes {stable_mosaic.version = 11 : i64} {
  func.func @kernel(%arg0: memref<8x40xf32, #tpu.memory_space<vmem>>, %arg1: memref<40x64xf32, #tpu.memory_space<vmem>>, %arg2: memref<1x64xf32, #tpu.memory_space<vmem>>, %arg3: memref<64x256xf32, #tpu.memory_space<vmem>>, %arg4: memref<64x256xf32, #tpu.memory_space<vmem>>, %arg5: memref<1x256xf32, #tpu.memory_space<vmem>>, %arg6: memref<128x256xf32, #tpu.memory_space<vmem>>, %arg7: memref<1x256xf32, #tpu.memory_space<vmem>>, %arg8: memref<8x64xf32, #tpu.memory_space<vmem>>) attributes {dimension_semantics = [], scalar_prefetch = 0 : i64, scratch_operands = 0 : i64, tpu.core_type = #tpu.core_type<tc>} {
    %c0 = arith.constant 0 : index
    %c0_0 = arith.constant 0 : index
    %0 = vector.load %arg0[%c0, %c0_0] : memref<8x40xf32, #tpu.memory_space<vmem>>, vector<8x40xf32>
    %c0_1 = arith.constant 0 : index
    %c0_2 = arith.constant 0 : index
    %1 = vector.load %arg1[%c0_1, %c0_2] : memref<40x64xf32, #tpu.memory_space<vmem>>, vector<40x64xf32>
    %cst = arith.constant dense<0.000000e+00> : vector<8x64xf32>
    %2 = tpu.matmul %0, %1, %cst {dimension_numbers = #tpu.dot_dimension_numbers<[1], [0], [0], [1], [0, 0, 1, 1], [], []>} : vector<8x40xf32>, vector<40x64xf32>, vector<8x64xf32> -> vector<8x64xf32>
    %c0_3 = arith.constant 0 : index
    %c0_4 = arith.constant 0 : index
    %3 = vector.load %arg2[%c0_3, %c0_4] : memref<1x64xf32, #tpu.memory_space<vmem>>, vector<1x64xf32>
    %4 = vector.broadcast %3 : vector<1x64xf32> to vector<8x64xf32>
    %5 = arith.addf %2, %4 : vector<8x64xf32>
    %c0_5 = arith.constant 0 : index
    %c0_6 = arith.constant 0 : index
    %6 = vector.load %arg3[%c0_5, %c0_6] : memref<64x256xf32, #tpu.memory_space<vmem>>, vector<64x256xf32>
    %cst_7 = arith.constant dense<0.000000e+00> : vector<8x256xf32>
    %7 = tpu.matmul %5, %6, %cst_7 {dimension_numbers = #tpu.dot_dimension_numbers<[1], [0], [0], [1], [0, 0, 1, 1], [], []>} : vector<8x64xf32>, vector<64x256xf32>, vector<8x256xf32> -> vector<8x256xf32>
    %c0_8 = arith.constant 0 : index
    %c0_9 = arith.constant 0 : index
    %8 = vector.load %arg5[%c0_8, %c0_9] : memref<1x256xf32, #tpu.memory_space<vmem>>, vector<1x256xf32>
    %9 = vector.broadcast %8 : vector<1x256xf32> to vector<8x256xf32>
    %10 = arith.addf %7, %9 : vector<8x256xf32>
    %cst_10 = arith.constant 0.000000e+00 : f32
    %11 = vector.broadcast %cst_10 : f32 to vector<1x64xf32>
    %cst_11 = arith.constant 0.000000e+00 : f32
    %12 = vector.broadcast %cst_11 : f32 to vector<1x64xf32>
    %cst_12 = arith.constant 0.000000e+00 : f32
    %13 = vector.broadcast %cst_12 : f32 to vector<1x64xf32>
    %cst_13 = arith.constant 0.000000e+00 : f32
    %14 = vector.broadcast %cst_13 : f32 to vector<1x64xf32>
    %15 = vector.extract_strided_slice %10 {offsets = [0, 0], sizes = [1, 256], strides = [1, 1]} : vector<8x256xf32> to vector<1x256xf32>
    %c0_14 = arith.constant 0 : index
    %c0_15 = arith.constant 0 : index
    %16 = vector.load %arg4[%c0_14, %c0_15] : memref<64x256xf32, #tpu.memory_space<vmem>>, vector<64x256xf32>
    %cst_16 = arith.constant dense<0.000000e+00> : vector<1x256xf32>
    %17 = tpu.matmul %11, %16, %cst_16 {dimension_numbers = #tpu.dot_dimension_numbers<[1], [0], [0], [1], [0, 0, 1, 1], [], []>} : vector<1x64xf32>, vector<64x256xf32>, vector<1x256xf32> -> vector<1x256xf32>
    %18 = arith.addf %15, %17 : vector<1x256xf32>
    %19 = math.tanh %18 : vector<1x256xf32>
    %20 = vector.extract_strided_slice %19 {offsets = [0, 0], sizes = [1, 64], strides = [1, 1]} : vector<1x256xf32> to vector<1x64xf32>
    %cst_17 = arith.constant 5.000000e-01 : f32
    %21 = vector.broadcast %cst_17 : f32 to vector<1x64xf32>
    %22 = arith.mulf %21, %20 : vector<1x64xf32>
    %cst_18 = arith.constant 5.000000e-01 : f32
    %23 = vector.broadcast %cst_18 : f32 to vector<1x64xf32>
    %24 = arith.addf %22, %23 : vector<1x64xf32>
    %25 = vector.extract_strided_slice %19 {offsets = [0, 64], sizes = [1, 64], strides = [1, 1]} : vector<1x256xf32> to vector<1x64xf32>
    %cst_19 = arith.constant 5.000000e-01 : f32
    %26 = vector.broadcast %cst_19 : f32 to vector<1x64xf32>
    %27 = arith.mulf %26, %25 : vector<1x64xf32>
    %cst_20 = arith.constant 5.000000e-01 : f32
    %28 = vector.broadcast %cst_20 : f32 to vector<1x64xf32>
    %29 = arith.addf %27, %28 : vector<1x64xf32>
    %30 = vector.extract_strided_slice %19 {offsets = [0, 128], sizes = [1, 64], strides = [1, 1]} : vector<1x256xf32> to vector<1x64xf32>
    %31 = vector.extract_strided_slice %19 {offsets = [0, 192], sizes = [1, 64], strides = [1, 1]} : vector<1x256xf32> to vector<1x64xf32>
    %cst_21 = arith.constant 5.000000e-01 : f32
    %32 = vector.broadcast %cst_21 : f32 to vector<1x64xf32>
    %33 = arith.mulf %32, %31 : vector<1x64xf32>
    %cst_22 = arith.constant 5.000000e-01 : f32
    %34 = vector.broadcast %cst_22 : f32 to vector<1x64xf32>
    %35 = arith.addf %33, %34 : vector<1x64xf32>
    %36 = arith.mulf %29, %13 : vector<1x64xf32>
    %37 = arith.mulf %24, %30 : vector<1x64xf32>
    %38 = arith.addf %36, %37 : vector<1x64xf32>
    %39 = math.tanh %38 : vector<1x64xf32>
    %40 = arith.mulf %35, %39 : vector<1x64xf32>
    %41 = tpu.concatenate %40, %12 in 1 : vector<1x64xf32>, vector<1x64xf32> -> vector<1x128xf32>
    %c0_23 = arith.constant 0 : index
    %c0_24 = arith.constant 0 : index
    %42 = vector.load %arg6[%c0_23, %c0_24] : memref<128x256xf32, #tpu.memory_space<vmem>>, vector<128x256xf32>
    %cst_25 = arith.constant dense<0.000000e+00> : vector<1x256xf32>
    %43 = tpu.matmul %41, %42, %cst_25 {dimension_numbers = #tpu.dot_dimension_numbers<[1], [0], [0], [1], [0, 0, 1, 1], [], []>} : vector<1x128xf32>, vector<128x256xf32>, vector<1x256xf32> -> vector<1x256xf32>
    %c0_26 = arith.constant 0 : index
    %c0_27 = arith.constant 0 : index
    %44 = vector.load %arg7[%c0_26, %c0_27] : memref<1x256xf32, #tpu.memory_space<vmem>>, vector<1x256xf32>
    %45 = arith.addf %43, %44 : vector<1x256xf32>
    %46 = math.tanh %45 : vector<1x256xf32>
    %47 = vector.extract_strided_slice %46 {offsets = [0, 0], sizes = [1, 64], strides = [1, 1]} : vector<1x256xf32> to vector<1x64xf32>
    %cst_28 = arith.constant 5.000000e-01 : f32
    %48 = vector.broadcast %cst_28 : f32 to vector<1x64xf32>
    %49 = arith.mulf %48, %47 : vector<1x64xf32>
    %cst_29 = arith.constant 5.000000e-01 : f32
    %50 = vector.broadcast %cst_29 : f32 to vector<1x64xf32>
    %51 = arith.addf %49, %50 : vector<1x64xf32>
    %52 = vector.extract_strided_slice %46 {offsets = [0, 64], sizes = [1, 64], strides = [1, 1]} : vector<1x256xf32> to vector<1x64xf32>
    %cst_30 = arith.constant 5.000000e-01 : f32
    %53 = vector.broadcast %cst_30 : f32 to vector<1x64xf32>
    %54 = arith.mulf %53, %52 : vector<1x64xf32>
    %cst_31 = arith.constant 5.000000e-01 : f32
    %55 = vector.broadcast %cst_31 : f32 to vector<1x64xf32>
    %56 = arith.addf %54, %55 : vector<1x64xf32>
    %57 = vector.extract_strided_slice %46 {offsets = [0, 128], sizes = [1, 64], strides = [1, 1]} : vector<1x256xf32> to vector<1x64xf32>
    %58 = vector.extract_strided_slice %46 {offsets = [0, 192], sizes = [1, 64], strides = [1, 1]} : vector<1x256xf32> to vector<1x64xf32>
    %cst_32 = arith.constant 5.000000e-01 : f32
    %59 = vector.broadcast %cst_32 : f32 to vector<1x64xf32>
    %60 = arith.mulf %59, %58 : vector<1x64xf32>
    %cst_33 = arith.constant 5.000000e-01 : f32
    %61 = vector.broadcast %cst_33 : f32 to vector<1x64xf32>
    %62 = arith.addf %60, %61 : vector<1x64xf32>
    %63 = arith.mulf %56, %14 : vector<1x64xf32>
    %64 = arith.mulf %51, %57 : vector<1x64xf32>
    %65 = arith.addf %63, %64 : vector<1x64xf32>
    %66 = math.tanh %65 : vector<1x64xf32>
    %67 = arith.mulf %62, %66 : vector<1x64xf32>
    %68 = vector.extract_strided_slice %10 {offsets = [1, 0], sizes = [1, 256], strides = [1, 1]} : vector<8x256xf32> to vector<1x256xf32>
    %c0_34 = arith.constant 0 : index
    %c0_35 = arith.constant 0 : index
    %69 = vector.load %arg4[%c0_34, %c0_35] : memref<64x256xf32, #tpu.memory_space<vmem>>, vector<64x256xf32>
    %cst_36 = arith.constant dense<0.000000e+00> : vector<1x256xf32>
    %70 = tpu.matmul %40, %69, %cst_36 {dimension_numbers = #tpu.dot_dimension_numbers<[1], [0], [0], [1], [0, 0, 1, 1], [], []>} : vector<1x64xf32>, vector<64x256xf32>, vector<1x256xf32> -> vector<1x256xf32>
    %71 = arith.addf %68, %70 : vector<1x256xf32>
    %72 = math.tanh %71 : vector<1x256xf32>
    %73 = vector.extract_strided_slice %72 {offsets = [0, 0], sizes = [1, 64], strides = [1, 1]} : vector<1x256xf32> to vector<1x64xf32>
    %cst_37 = arith.constant 5.000000e-01 : f32
    %74 = vector.broadcast %cst_37 : f32 to vector<1x64xf32>
    %75 = arith.mulf %74, %73 : vector<1x64xf32>
    %cst_38 = arith.constant 5.000000e-01 : f32
    %76 = vector.broadcast %cst_38 : f32 to vector<1x64xf32>
    %77 = arith.addf %75, %76 : vector<1x64xf32>
    %78 = vector.extract_strided_slice %72 {offsets = [0, 64], sizes = [1, 64], strides = [1, 1]} : vector<1x256xf32> to vector<1x64xf32>
    %cst_39 = arith.constant 5.000000e-01 : f32
    %79 = vector.broadcast %cst_39 : f32 to vector<1x64xf32>
    %80 = arith.mulf %79, %78 : vector<1x64xf32>
    %cst_40 = arith.constant 5.000000e-01 : f32
    %81 = vector.broadcast %cst_40 : f32 to vector<1x64xf32>
    %82 = arith.addf %80, %81 : vector<1x64xf32>
    %83 = vector.extract_strided_slice %72 {offsets = [0, 128], sizes = [1, 64], strides = [1, 1]} : vector<1x256xf32> to vector<1x64xf32>
    %84 = vector.extract_strided_slice %72 {offsets = [0, 192], sizes = [1, 64], strides = [1, 1]} : vector<1x256xf32> to vector<1x64xf32>
    %cst_41 = arith.constant 5.000000e-01 : f32
    %85 = vector.broadcast %cst_41 : f32 to vector<1x64xf32>
    %86 = arith.mulf %85, %84 : vector<1x64xf32>
    %cst_42 = arith.constant 5.000000e-01 : f32
    %87 = vector.broadcast %cst_42 : f32 to vector<1x64xf32>
    %88 = arith.addf %86, %87 : vector<1x64xf32>
    %89 = arith.mulf %82, %38 : vector<1x64xf32>
    %90 = arith.mulf %77, %83 : vector<1x64xf32>
    %91 = arith.addf %89, %90 : vector<1x64xf32>
    %92 = math.tanh %91 : vector<1x64xf32>
    %93 = arith.mulf %88, %92 : vector<1x64xf32>
    %94 = tpu.concatenate %93, %67 in 1 : vector<1x64xf32>, vector<1x64xf32> -> vector<1x128xf32>
    %c0_43 = arith.constant 0 : index
    %c0_44 = arith.constant 0 : index
    %95 = vector.load %arg6[%c0_43, %c0_44] : memref<128x256xf32, #tpu.memory_space<vmem>>, vector<128x256xf32>
    %cst_45 = arith.constant dense<0.000000e+00> : vector<1x256xf32>
    %96 = tpu.matmul %94, %95, %cst_45 {dimension_numbers = #tpu.dot_dimension_numbers<[1], [0], [0], [1], [0, 0, 1, 1], [], []>} : vector<1x128xf32>, vector<128x256xf32>, vector<1x256xf32> -> vector<1x256xf32>
    %c0_46 = arith.constant 0 : index
    %c0_47 = arith.constant 0 : index
    %97 = vector.load %arg7[%c0_46, %c0_47] : memref<1x256xf32, #tpu.memory_space<vmem>>, vector<1x256xf32>
    %98 = arith.addf %96, %97 : vector<1x256xf32>
    %99 = math.tanh %98 : vector<1x256xf32>
    %100 = vector.extract_strided_slice %99 {offsets = [0, 0], sizes = [1, 64], strides = [1, 1]} : vector<1x256xf32> to vector<1x64xf32>
    %cst_48 = arith.constant 5.000000e-01 : f32
    %101 = vector.broadcast %cst_48 : f32 to vector<1x64xf32>
    %102 = arith.mulf %101, %100 : vector<1x64xf32>
    %cst_49 = arith.constant 5.000000e-01 : f32
    %103 = vector.broadcast %cst_49 : f32 to vector<1x64xf32>
    %104 = arith.addf %102, %103 : vector<1x64xf32>
    %105 = vector.extract_strided_slice %99 {offsets = [0, 64], sizes = [1, 64], strides = [1, 1]} : vector<1x256xf32> to vector<1x64xf32>
    %cst_50 = arith.constant 5.000000e-01 : f32
    %106 = vector.broadcast %cst_50 : f32 to vector<1x64xf32>
    %107 = arith.mulf %106, %105 : vector<1x64xf32>
    %cst_51 = arith.constant 5.000000e-01 : f32
    %108 = vector.broadcast %cst_51 : f32 to vector<1x64xf32>
    %109 = arith.addf %107, %108 : vector<1x64xf32>
    %110 = vector.extract_strided_slice %99 {offsets = [0, 128], sizes = [1, 64], strides = [1, 1]} : vector<1x256xf32> to vector<1x64xf32>
    %111 = vector.extract_strided_slice %99 {offsets = [0, 192], sizes = [1, 64], strides = [1, 1]} : vector<1x256xf32> to vector<1x64xf32>
    %cst_52 = arith.constant 5.000000e-01 : f32
    %112 = vector.broadcast %cst_52 : f32 to vector<1x64xf32>
    %113 = arith.mulf %112, %111 : vector<1x64xf32>
    %cst_53 = arith.constant 5.000000e-01 : f32
    %114 = vector.broadcast %cst_53 : f32 to vector<1x64xf32>
    %115 = arith.addf %113, %114 : vector<1x64xf32>
    %116 = arith.mulf %109, %65 : vector<1x64xf32>
    %117 = arith.mulf %104, %110 : vector<1x64xf32>
    %118 = arith.addf %116, %117 : vector<1x64xf32>
    %119 = math.tanh %118 : vector<1x64xf32>
    %120 = arith.mulf %115, %119 : vector<1x64xf32>
    %121 = vector.extract_strided_slice %10 {offsets = [2, 0], sizes = [1, 256], strides = [1, 1]} : vector<8x256xf32> to vector<1x256xf32>
    %c0_54 = arith.constant 0 : index
    %c0_55 = arith.constant 0 : index
    %122 = vector.load %arg4[%c0_54, %c0_55] : memref<64x256xf32, #tpu.memory_space<vmem>>, vector<64x256xf32>
    %cst_56 = arith.constant dense<0.000000e+00> : vector<1x256xf32>
    %123 = tpu.matmul %93, %122, %cst_56 {dimension_numbers = #tpu.dot_dimension_numbers<[1], [0], [0], [1], [0, 0, 1, 1], [], []>} : vector<1x64xf32>, vector<64x256xf32>, vector<1x256xf32> -> vector<1x256xf32>
    %124 = arith.addf %121, %123 : vector<1x256xf32>
    %125 = math.tanh %124 : vector<1x256xf32>
    %126 = vector.extract_strided_slice %125 {offsets = [0, 0], sizes = [1, 64], strides = [1, 1]} : vector<1x256xf32> to vector<1x64xf32>
    %cst_57 = arith.constant 5.000000e-01 : f32
    %127 = vector.broadcast %cst_57 : f32 to vector<1x64xf32>
    %128 = arith.mulf %127, %126 : vector<1x64xf32>
    %cst_58 = arith.constant 5.000000e-01 : f32
    %129 = vector.broadcast %cst_58 : f32 to vector<1x64xf32>
    %130 = arith.addf %128, %129 : vector<1x64xf32>
    %131 = vector.extract_strided_slice %125 {offsets = [0, 64], sizes = [1, 64], strides = [1, 1]} : vector<1x256xf32> to vector<1x64xf32>
    %cst_59 = arith.constant 5.000000e-01 : f32
    %132 = vector.broadcast %cst_59 : f32 to vector<1x64xf32>
    %133 = arith.mulf %132, %131 : vector<1x64xf32>
    %cst_60 = arith.constant 5.000000e-01 : f32
    %134 = vector.broadcast %cst_60 : f32 to vector<1x64xf32>
    %135 = arith.addf %133, %134 : vector<1x64xf32>
    %136 = vector.extract_strided_slice %125 {offsets = [0, 128], sizes = [1, 64], strides = [1, 1]} : vector<1x256xf32> to vector<1x64xf32>
    %137 = vector.extract_strided_slice %125 {offsets = [0, 192], sizes = [1, 64], strides = [1, 1]} : vector<1x256xf32> to vector<1x64xf32>
    %cst_61 = arith.constant 5.000000e-01 : f32
    %138 = vector.broadcast %cst_61 : f32 to vector<1x64xf32>
    %139 = arith.mulf %138, %137 : vector<1x64xf32>
    %cst_62 = arith.constant 5.000000e-01 : f32
    %140 = vector.broadcast %cst_62 : f32 to vector<1x64xf32>
    %141 = arith.addf %139, %140 : vector<1x64xf32>
    %142 = arith.mulf %135, %91 : vector<1x64xf32>
    %143 = arith.mulf %130, %136 : vector<1x64xf32>
    %144 = arith.addf %142, %143 : vector<1x64xf32>
    %145 = math.tanh %144 : vector<1x64xf32>
    %146 = arith.mulf %141, %145 : vector<1x64xf32>
    %147 = tpu.concatenate %146, %120 in 1 : vector<1x64xf32>, vector<1x64xf32> -> vector<1x128xf32>
    %c0_63 = arith.constant 0 : index
    %c0_64 = arith.constant 0 : index
    %148 = vector.load %arg6[%c0_63, %c0_64] : memref<128x256xf32, #tpu.memory_space<vmem>>, vector<128x256xf32>
    %cst_65 = arith.constant dense<0.000000e+00> : vector<1x256xf32>
    %149 = tpu.matmul %147, %148, %cst_65 {dimension_numbers = #tpu.dot_dimension_numbers<[1], [0], [0], [1], [0, 0, 1, 1], [], []>} : vector<1x128xf32>, vector<128x256xf32>, vector<1x256xf32> -> vector<1x256xf32>
    %c0_66 = arith.constant 0 : index
    %c0_67 = arith.constant 0 : index
    %150 = vector.load %arg7[%c0_66, %c0_67] : memref<1x256xf32, #tpu.memory_space<vmem>>, vector<1x256xf32>
    %151 = arith.addf %149, %150 : vector<1x256xf32>
    %152 = math.tanh %151 : vector<1x256xf32>
    %153 = vector.extract_strided_slice %152 {offsets = [0, 0], sizes = [1, 64], strides = [1, 1]} : vector<1x256xf32> to vector<1x64xf32>
    %cst_68 = arith.constant 5.000000e-01 : f32
    %154 = vector.broadcast %cst_68 : f32 to vector<1x64xf32>
    %155 = arith.mulf %154, %153 : vector<1x64xf32>
    %cst_69 = arith.constant 5.000000e-01 : f32
    %156 = vector.broadcast %cst_69 : f32 to vector<1x64xf32>
    %157 = arith.addf %155, %156 : vector<1x64xf32>
    %158 = vector.extract_strided_slice %152 {offsets = [0, 64], sizes = [1, 64], strides = [1, 1]} : vector<1x256xf32> to vector<1x64xf32>
    %cst_70 = arith.constant 5.000000e-01 : f32
    %159 = vector.broadcast %cst_70 : f32 to vector<1x64xf32>
    %160 = arith.mulf %159, %158 : vector<1x64xf32>
    %cst_71 = arith.constant 5.000000e-01 : f32
    %161 = vector.broadcast %cst_71 : f32 to vector<1x64xf32>
    %162 = arith.addf %160, %161 : vector<1x64xf32>
    %163 = vector.extract_strided_slice %152 {offsets = [0, 128], sizes = [1, 64], strides = [1, 1]} : vector<1x256xf32> to vector<1x64xf32>
    %164 = vector.extract_strided_slice %152 {offsets = [0, 192], sizes = [1, 64], strides = [1, 1]} : vector<1x256xf32> to vector<1x64xf32>
    %cst_72 = arith.constant 5.000000e-01 : f32
    %165 = vector.broadcast %cst_72 : f32 to vector<1x64xf32>
    %166 = arith.mulf %165, %164 : vector<1x64xf32>
    %cst_73 = arith.constant 5.000000e-01 : f32
    %167 = vector.broadcast %cst_73 : f32 to vector<1x64xf32>
    %168 = arith.addf %166, %167 : vector<1x64xf32>
    %169 = arith.mulf %162, %118 : vector<1x64xf32>
    %170 = arith.mulf %157, %163 : vector<1x64xf32>
    %171 = arith.addf %169, %170 : vector<1x64xf32>
    %172 = math.tanh %171 : vector<1x64xf32>
    %173 = arith.mulf %168, %172 : vector<1x64xf32>
    %174 = vector.extract_strided_slice %10 {offsets = [3, 0], sizes = [1, 256], strides = [1, 1]} : vector<8x256xf32> to vector<1x256xf32>
    %c0_74 = arith.constant 0 : index
    %c0_75 = arith.constant 0 : index
    %175 = vector.load %arg4[%c0_74, %c0_75] : memref<64x256xf32, #tpu.memory_space<vmem>>, vector<64x256xf32>
    %cst_76 = arith.constant dense<0.000000e+00> : vector<1x256xf32>
    %176 = tpu.matmul %146, %175, %cst_76 {dimension_numbers = #tpu.dot_dimension_numbers<[1], [0], [0], [1], [0, 0, 1, 1], [], []>} : vector<1x64xf32>, vector<64x256xf32>, vector<1x256xf32> -> vector<1x256xf32>
    %177 = arith.addf %174, %176 : vector<1x256xf32>
    %178 = math.tanh %177 : vector<1x256xf32>
    %179 = vector.extract_strided_slice %178 {offsets = [0, 0], sizes = [1, 64], strides = [1, 1]} : vector<1x256xf32> to vector<1x64xf32>
    %cst_77 = arith.constant 5.000000e-01 : f32
    %180 = vector.broadcast %cst_77 : f32 to vector<1x64xf32>
    %181 = arith.mulf %180, %179 : vector<1x64xf32>
    %cst_78 = arith.constant 5.000000e-01 : f32
    %182 = vector.broadcast %cst_78 : f32 to vector<1x64xf32>
    %183 = arith.addf %181, %182 : vector<1x64xf32>
    %184 = vector.extract_strided_slice %178 {offsets = [0, 64], sizes = [1, 64], strides = [1, 1]} : vector<1x256xf32> to vector<1x64xf32>
    %cst_79 = arith.constant 5.000000e-01 : f32
    %185 = vector.broadcast %cst_79 : f32 to vector<1x64xf32>
    %186 = arith.mulf %185, %184 : vector<1x64xf32>
    %cst_80 = arith.constant 5.000000e-01 : f32
    %187 = vector.broadcast %cst_80 : f32 to vector<1x64xf32>
    %188 = arith.addf %186, %187 : vector<1x64xf32>
    %189 = vector.extract_strided_slice %178 {offsets = [0, 128], sizes = [1, 64], strides = [1, 1]} : vector<1x256xf32> to vector<1x64xf32>
    %190 = vector.extract_strided_slice %178 {offsets = [0, 192], sizes = [1, 64], strides = [1, 1]} : vector<1x256xf32> to vector<1x64xf32>
    %cst_81 = arith.constant 5.000000e-01 : f32
    %191 = vector.broadcast %cst_81 : f32 to vector<1x64xf32>
    %192 = arith.mulf %191, %190 : vector<1x64xf32>
    %cst_82 = arith.constant 5.000000e-01 : f32
    %193 = vector.broadcast %cst_82 : f32 to vector<1x64xf32>
    %194 = arith.addf %192, %193 : vector<1x64xf32>
    %195 = arith.mulf %188, %144 : vector<1x64xf32>
    %196 = arith.mulf %183, %189 : vector<1x64xf32>
    %197 = arith.addf %195, %196 : vector<1x64xf32>
    %198 = math.tanh %197 : vector<1x64xf32>
    %199 = arith.mulf %194, %198 : vector<1x64xf32>
    %200 = tpu.concatenate %199, %173 in 1 : vector<1x64xf32>, vector<1x64xf32> -> vector<1x128xf32>
    %c0_83 = arith.constant 0 : index
    %c0_84 = arith.constant 0 : index
    %201 = vector.load %arg6[%c0_83, %c0_84] : memref<128x256xf32, #tpu.memory_space<vmem>>, vector<128x256xf32>
    %cst_85 = arith.constant dense<0.000000e+00> : vector<1x256xf32>
    %202 = tpu.matmul %200, %201, %cst_85 {dimension_numbers = #tpu.dot_dimension_numbers<[1], [0], [0], [1], [0, 0, 1, 1], [], []>} : vector<1x128xf32>, vector<128x256xf32>, vector<1x256xf32> -> vector<1x256xf32>
    %c0_86 = arith.constant 0 : index
    %c0_87 = arith.constant 0 : index
    %203 = vector.load %arg7[%c0_86, %c0_87] : memref<1x256xf32, #tpu.memory_space<vmem>>, vector<1x256xf32>
    %204 = arith.addf %202, %203 : vector<1x256xf32>
    %205 = math.tanh %204 : vector<1x256xf32>
    %206 = vector.extract_strided_slice %205 {offsets = [0, 0], sizes = [1, 64], strides = [1, 1]} : vector<1x256xf32> to vector<1x64xf32>
    %cst_88 = arith.constant 5.000000e-01 : f32
    %207 = vector.broadcast %cst_88 : f32 to vector<1x64xf32>
    %208 = arith.mulf %207, %206 : vector<1x64xf32>
    %cst_89 = arith.constant 5.000000e-01 : f32
    %209 = vector.broadcast %cst_89 : f32 to vector<1x64xf32>
    %210 = arith.addf %208, %209 : vector<1x64xf32>
    %211 = vector.extract_strided_slice %205 {offsets = [0, 64], sizes = [1, 64], strides = [1, 1]} : vector<1x256xf32> to vector<1x64xf32>
    %cst_90 = arith.constant 5.000000e-01 : f32
    %212 = vector.broadcast %cst_90 : f32 to vector<1x64xf32>
    %213 = arith.mulf %212, %211 : vector<1x64xf32>
    %cst_91 = arith.constant 5.000000e-01 : f32
    %214 = vector.broadcast %cst_91 : f32 to vector<1x64xf32>
    %215 = arith.addf %213, %214 : vector<1x64xf32>
    %216 = vector.extract_strided_slice %205 {offsets = [0, 128], sizes = [1, 64], strides = [1, 1]} : vector<1x256xf32> to vector<1x64xf32>
    %217 = vector.extract_strided_slice %205 {offsets = [0, 192], sizes = [1, 64], strides = [1, 1]} : vector<1x256xf32> to vector<1x64xf32>
    %cst_92 = arith.constant 5.000000e-01 : f32
    %218 = vector.broadcast %cst_92 : f32 to vector<1x64xf32>
    %219 = arith.mulf %218, %217 : vector<1x64xf32>
    %cst_93 = arith.constant 5.000000e-01 : f32
    %220 = vector.broadcast %cst_93 : f32 to vector<1x64xf32>
    %221 = arith.addf %219, %220 : vector<1x64xf32>
    %222 = arith.mulf %215, %171 : vector<1x64xf32>
    %223 = arith.mulf %210, %216 : vector<1x64xf32>
    %224 = arith.addf %222, %223 : vector<1x64xf32>
    %225 = math.tanh %224 : vector<1x64xf32>
    %226 = arith.mulf %221, %225 : vector<1x64xf32>
    %227 = vector.extract_strided_slice %10 {offsets = [4, 0], sizes = [1, 256], strides = [1, 1]} : vector<8x256xf32> to vector<1x256xf32>
    %c0_94 = arith.constant 0 : index
    %c0_95 = arith.constant 0 : index
    %228 = vector.load %arg4[%c0_94, %c0_95] : memref<64x256xf32, #tpu.memory_space<vmem>>, vector<64x256xf32>
    %cst_96 = arith.constant dense<0.000000e+00> : vector<1x256xf32>
    %229 = tpu.matmul %199, %228, %cst_96 {dimension_numbers = #tpu.dot_dimension_numbers<[1], [0], [0], [1], [0, 0, 1, 1], [], []>} : vector<1x64xf32>, vector<64x256xf32>, vector<1x256xf32> -> vector<1x256xf32>
    %230 = arith.addf %227, %229 : vector<1x256xf32>
    %231 = math.tanh %230 : vector<1x256xf32>
    %232 = vector.extract_strided_slice %231 {offsets = [0, 0], sizes = [1, 64], strides = [1, 1]} : vector<1x256xf32> to vector<1x64xf32>
    %cst_97 = arith.constant 5.000000e-01 : f32
    %233 = vector.broadcast %cst_97 : f32 to vector<1x64xf32>
    %234 = arith.mulf %233, %232 : vector<1x64xf32>
    %cst_98 = arith.constant 5.000000e-01 : f32
    %235 = vector.broadcast %cst_98 : f32 to vector<1x64xf32>
    %236 = arith.addf %234, %235 : vector<1x64xf32>
    %237 = vector.extract_strided_slice %231 {offsets = [0, 64], sizes = [1, 64], strides = [1, 1]} : vector<1x256xf32> to vector<1x64xf32>
    %cst_99 = arith.constant 5.000000e-01 : f32
    %238 = vector.broadcast %cst_99 : f32 to vector<1x64xf32>
    %239 = arith.mulf %238, %237 : vector<1x64xf32>
    %cst_100 = arith.constant 5.000000e-01 : f32
    %240 = vector.broadcast %cst_100 : f32 to vector<1x64xf32>
    %241 = arith.addf %239, %240 : vector<1x64xf32>
    %242 = vector.extract_strided_slice %231 {offsets = [0, 128], sizes = [1, 64], strides = [1, 1]} : vector<1x256xf32> to vector<1x64xf32>
    %243 = vector.extract_strided_slice %231 {offsets = [0, 192], sizes = [1, 64], strides = [1, 1]} : vector<1x256xf32> to vector<1x64xf32>
    %cst_101 = arith.constant 5.000000e-01 : f32
    %244 = vector.broadcast %cst_101 : f32 to vector<1x64xf32>
    %245 = arith.mulf %244, %243 : vector<1x64xf32>
    %cst_102 = arith.constant 5.000000e-01 : f32
    %246 = vector.broadcast %cst_102 : f32 to vector<1x64xf32>
    %247 = arith.addf %245, %246 : vector<1x64xf32>
    %248 = arith.mulf %241, %197 : vector<1x64xf32>
    %249 = arith.mulf %236, %242 : vector<1x64xf32>
    %250 = arith.addf %248, %249 : vector<1x64xf32>
    %251 = math.tanh %250 : vector<1x64xf32>
    %252 = arith.mulf %247, %251 : vector<1x64xf32>
    %253 = tpu.concatenate %252, %226 in 1 : vector<1x64xf32>, vector<1x64xf32> -> vector<1x128xf32>
    %c0_103 = arith.constant 0 : index
    %c0_104 = arith.constant 0 : index
    %254 = vector.load %arg6[%c0_103, %c0_104] : memref<128x256xf32, #tpu.memory_space<vmem>>, vector<128x256xf32>
    %cst_105 = arith.constant dense<0.000000e+00> : vector<1x256xf32>
    %255 = tpu.matmul %253, %254, %cst_105 {dimension_numbers = #tpu.dot_dimension_numbers<[1], [0], [0], [1], [0, 0, 1, 1], [], []>} : vector<1x128xf32>, vector<128x256xf32>, vector<1x256xf32> -> vector<1x256xf32>
    %c0_106 = arith.constant 0 : index
    %c0_107 = arith.constant 0 : index
    %256 = vector.load %arg7[%c0_106, %c0_107] : memref<1x256xf32, #tpu.memory_space<vmem>>, vector<1x256xf32>
    %257 = arith.addf %255, %256 : vector<1x256xf32>
    %258 = math.tanh %257 : vector<1x256xf32>
    %259 = vector.extract_strided_slice %258 {offsets = [0, 0], sizes = [1, 64], strides = [1, 1]} : vector<1x256xf32> to vector<1x64xf32>
    %cst_108 = arith.constant 5.000000e-01 : f32
    %260 = vector.broadcast %cst_108 : f32 to vector<1x64xf32>
    %261 = arith.mulf %260, %259 : vector<1x64xf32>
    %cst_109 = arith.constant 5.000000e-01 : f32
    %262 = vector.broadcast %cst_109 : f32 to vector<1x64xf32>
    %263 = arith.addf %261, %262 : vector<1x64xf32>
    %264 = vector.extract_strided_slice %258 {offsets = [0, 64], sizes = [1, 64], strides = [1, 1]} : vector<1x256xf32> to vector<1x64xf32>
    %cst_110 = arith.constant 5.000000e-01 : f32
    %265 = vector.broadcast %cst_110 : f32 to vector<1x64xf32>
    %266 = arith.mulf %265, %264 : vector<1x64xf32>
    %cst_111 = arith.constant 5.000000e-01 : f32
    %267 = vector.broadcast %cst_111 : f32 to vector<1x64xf32>
    %268 = arith.addf %266, %267 : vector<1x64xf32>
    %269 = vector.extract_strided_slice %258 {offsets = [0, 128], sizes = [1, 64], strides = [1, 1]} : vector<1x256xf32> to vector<1x64xf32>
    %270 = vector.extract_strided_slice %258 {offsets = [0, 192], sizes = [1, 64], strides = [1, 1]} : vector<1x256xf32> to vector<1x64xf32>
    %cst_112 = arith.constant 5.000000e-01 : f32
    %271 = vector.broadcast %cst_112 : f32 to vector<1x64xf32>
    %272 = arith.mulf %271, %270 : vector<1x64xf32>
    %cst_113 = arith.constant 5.000000e-01 : f32
    %273 = vector.broadcast %cst_113 : f32 to vector<1x64xf32>
    %274 = arith.addf %272, %273 : vector<1x64xf32>
    %275 = arith.mulf %268, %224 : vector<1x64xf32>
    %276 = arith.mulf %263, %269 : vector<1x64xf32>
    %277 = arith.addf %275, %276 : vector<1x64xf32>
    %278 = math.tanh %277 : vector<1x64xf32>
    %279 = arith.mulf %274, %278 : vector<1x64xf32>
    %280 = vector.extract_strided_slice %10 {offsets = [5, 0], sizes = [1, 256], strides = [1, 1]} : vector<8x256xf32> to vector<1x256xf32>
    %c0_114 = arith.constant 0 : index
    %c0_115 = arith.constant 0 : index
    %281 = vector.load %arg4[%c0_114, %c0_115] : memref<64x256xf32, #tpu.memory_space<vmem>>, vector<64x256xf32>
    %cst_116 = arith.constant dense<0.000000e+00> : vector<1x256xf32>
    %282 = tpu.matmul %252, %281, %cst_116 {dimension_numbers = #tpu.dot_dimension_numbers<[1], [0], [0], [1], [0, 0, 1, 1], [], []>} : vector<1x64xf32>, vector<64x256xf32>, vector<1x256xf32> -> vector<1x256xf32>
    %283 = arith.addf %280, %282 : vector<1x256xf32>
    %284 = math.tanh %283 : vector<1x256xf32>
    %285 = vector.extract_strided_slice %284 {offsets = [0, 0], sizes = [1, 64], strides = [1, 1]} : vector<1x256xf32> to vector<1x64xf32>
    %cst_117 = arith.constant 5.000000e-01 : f32
    %286 = vector.broadcast %cst_117 : f32 to vector<1x64xf32>
    %287 = arith.mulf %286, %285 : vector<1x64xf32>
    %cst_118 = arith.constant 5.000000e-01 : f32
    %288 = vector.broadcast %cst_118 : f32 to vector<1x64xf32>
    %289 = arith.addf %287, %288 : vector<1x64xf32>
    %290 = vector.extract_strided_slice %284 {offsets = [0, 64], sizes = [1, 64], strides = [1, 1]} : vector<1x256xf32> to vector<1x64xf32>
    %cst_119 = arith.constant 5.000000e-01 : f32
    %291 = vector.broadcast %cst_119 : f32 to vector<1x64xf32>
    %292 = arith.mulf %291, %290 : vector<1x64xf32>
    %cst_120 = arith.constant 5.000000e-01 : f32
    %293 = vector.broadcast %cst_120 : f32 to vector<1x64xf32>
    %294 = arith.addf %292, %293 : vector<1x64xf32>
    %295 = vector.extract_strided_slice %284 {offsets = [0, 128], sizes = [1, 64], strides = [1, 1]} : vector<1x256xf32> to vector<1x64xf32>
    %296 = vector.extract_strided_slice %284 {offsets = [0, 192], sizes = [1, 64], strides = [1, 1]} : vector<1x256xf32> to vector<1x64xf32>
    %cst_121 = arith.constant 5.000000e-01 : f32
    %297 = vector.broadcast %cst_121 : f32 to vector<1x64xf32>
    %298 = arith.mulf %297, %296 : vector<1x64xf32>
    %cst_122 = arith.constant 5.000000e-01 : f32
    %299 = vector.broadcast %cst_122 : f32 to vector<1x64xf32>
    %300 = arith.addf %298, %299 : vector<1x64xf32>
    %301 = arith.mulf %294, %250 : vector<1x64xf32>
    %302 = arith.mulf %289, %295 : vector<1x64xf32>
    %303 = arith.addf %301, %302 : vector<1x64xf32>
    %304 = math.tanh %303 : vector<1x64xf32>
    %305 = arith.mulf %300, %304 : vector<1x64xf32>
    %306 = tpu.concatenate %305, %279 in 1 : vector<1x64xf32>, vector<1x64xf32> -> vector<1x128xf32>
    %c0_123 = arith.constant 0 : index
    %c0_124 = arith.constant 0 : index
    %307 = vector.load %arg6[%c0_123, %c0_124] : memref<128x256xf32, #tpu.memory_space<vmem>>, vector<128x256xf32>
    %cst_125 = arith.constant dense<0.000000e+00> : vector<1x256xf32>
    %308 = tpu.matmul %306, %307, %cst_125 {dimension_numbers = #tpu.dot_dimension_numbers<[1], [0], [0], [1], [0, 0, 1, 1], [], []>} : vector<1x128xf32>, vector<128x256xf32>, vector<1x256xf32> -> vector<1x256xf32>
    %c0_126 = arith.constant 0 : index
    %c0_127 = arith.constant 0 : index
    %309 = vector.load %arg7[%c0_126, %c0_127] : memref<1x256xf32, #tpu.memory_space<vmem>>, vector<1x256xf32>
    %310 = arith.addf %308, %309 : vector<1x256xf32>
    %311 = math.tanh %310 : vector<1x256xf32>
    %312 = vector.extract_strided_slice %311 {offsets = [0, 0], sizes = [1, 64], strides = [1, 1]} : vector<1x256xf32> to vector<1x64xf32>
    %cst_128 = arith.constant 5.000000e-01 : f32
    %313 = vector.broadcast %cst_128 : f32 to vector<1x64xf32>
    %314 = arith.mulf %313, %312 : vector<1x64xf32>
    %cst_129 = arith.constant 5.000000e-01 : f32
    %315 = vector.broadcast %cst_129 : f32 to vector<1x64xf32>
    %316 = arith.addf %314, %315 : vector<1x64xf32>
    %317 = vector.extract_strided_slice %311 {offsets = [0, 64], sizes = [1, 64], strides = [1, 1]} : vector<1x256xf32> to vector<1x64xf32>
    %cst_130 = arith.constant 5.000000e-01 : f32
    %318 = vector.broadcast %cst_130 : f32 to vector<1x64xf32>
    %319 = arith.mulf %318, %317 : vector<1x64xf32>
    %cst_131 = arith.constant 5.000000e-01 : f32
    %320 = vector.broadcast %cst_131 : f32 to vector<1x64xf32>
    %321 = arith.addf %319, %320 : vector<1x64xf32>
    %322 = vector.extract_strided_slice %311 {offsets = [0, 128], sizes = [1, 64], strides = [1, 1]} : vector<1x256xf32> to vector<1x64xf32>
    %323 = vector.extract_strided_slice %311 {offsets = [0, 192], sizes = [1, 64], strides = [1, 1]} : vector<1x256xf32> to vector<1x64xf32>
    %cst_132 = arith.constant 5.000000e-01 : f32
    %324 = vector.broadcast %cst_132 : f32 to vector<1x64xf32>
    %325 = arith.mulf %324, %323 : vector<1x64xf32>
    %cst_133 = arith.constant 5.000000e-01 : f32
    %326 = vector.broadcast %cst_133 : f32 to vector<1x64xf32>
    %327 = arith.addf %325, %326 : vector<1x64xf32>
    %328 = arith.mulf %321, %277 : vector<1x64xf32>
    %329 = arith.mulf %316, %322 : vector<1x64xf32>
    %330 = arith.addf %328, %329 : vector<1x64xf32>
    %331 = math.tanh %330 : vector<1x64xf32>
    %332 = arith.mulf %327, %331 : vector<1x64xf32>
    %333 = vector.extract_strided_slice %10 {offsets = [6, 0], sizes = [1, 256], strides = [1, 1]} : vector<8x256xf32> to vector<1x256xf32>
    %c0_134 = arith.constant 0 : index
    %c0_135 = arith.constant 0 : index
    %334 = vector.load %arg4[%c0_134, %c0_135] : memref<64x256xf32, #tpu.memory_space<vmem>>, vector<64x256xf32>
    %cst_136 = arith.constant dense<0.000000e+00> : vector<1x256xf32>
    %335 = tpu.matmul %305, %334, %cst_136 {dimension_numbers = #tpu.dot_dimension_numbers<[1], [0], [0], [1], [0, 0, 1, 1], [], []>} : vector<1x64xf32>, vector<64x256xf32>, vector<1x256xf32> -> vector<1x256xf32>
    %336 = arith.addf %333, %335 : vector<1x256xf32>
    %337 = math.tanh %336 : vector<1x256xf32>
    %338 = vector.extract_strided_slice %337 {offsets = [0, 0], sizes = [1, 64], strides = [1, 1]} : vector<1x256xf32> to vector<1x64xf32>
    %cst_137 = arith.constant 5.000000e-01 : f32
    %339 = vector.broadcast %cst_137 : f32 to vector<1x64xf32>
    %340 = arith.mulf %339, %338 : vector<1x64xf32>
    %cst_138 = arith.constant 5.000000e-01 : f32
    %341 = vector.broadcast %cst_138 : f32 to vector<1x64xf32>
    %342 = arith.addf %340, %341 : vector<1x64xf32>
    %343 = vector.extract_strided_slice %337 {offsets = [0, 64], sizes = [1, 64], strides = [1, 1]} : vector<1x256xf32> to vector<1x64xf32>
    %cst_139 = arith.constant 5.000000e-01 : f32
    %344 = vector.broadcast %cst_139 : f32 to vector<1x64xf32>
    %345 = arith.mulf %344, %343 : vector<1x64xf32>
    %cst_140 = arith.constant 5.000000e-01 : f32
    %346 = vector.broadcast %cst_140 : f32 to vector<1x64xf32>
    %347 = arith.addf %345, %346 : vector<1x64xf32>
    %348 = vector.extract_strided_slice %337 {offsets = [0, 128], sizes = [1, 64], strides = [1, 1]} : vector<1x256xf32> to vector<1x64xf32>
    %349 = vector.extract_strided_slice %337 {offsets = [0, 192], sizes = [1, 64], strides = [1, 1]} : vector<1x256xf32> to vector<1x64xf32>
    %cst_141 = arith.constant 5.000000e-01 : f32
    %350 = vector.broadcast %cst_141 : f32 to vector<1x64xf32>
    %351 = arith.mulf %350, %349 : vector<1x64xf32>
    %cst_142 = arith.constant 5.000000e-01 : f32
    %352 = vector.broadcast %cst_142 : f32 to vector<1x64xf32>
    %353 = arith.addf %351, %352 : vector<1x64xf32>
    %354 = arith.mulf %347, %303 : vector<1x64xf32>
    %355 = arith.mulf %342, %348 : vector<1x64xf32>
    %356 = arith.addf %354, %355 : vector<1x64xf32>
    %357 = math.tanh %356 : vector<1x64xf32>
    %358 = arith.mulf %353, %357 : vector<1x64xf32>
    %359 = tpu.concatenate %358, %332 in 1 : vector<1x64xf32>, vector<1x64xf32> -> vector<1x128xf32>
    %c0_143 = arith.constant 0 : index
    %c0_144 = arith.constant 0 : index
    %360 = vector.load %arg6[%c0_143, %c0_144] : memref<128x256xf32, #tpu.memory_space<vmem>>, vector<128x256xf32>
    %cst_145 = arith.constant dense<0.000000e+00> : vector<1x256xf32>
    %361 = tpu.matmul %359, %360, %cst_145 {dimension_numbers = #tpu.dot_dimension_numbers<[1], [0], [0], [1], [0, 0, 1, 1], [], []>} : vector<1x128xf32>, vector<128x256xf32>, vector<1x256xf32> -> vector<1x256xf32>
    %c0_146 = arith.constant 0 : index
    %c0_147 = arith.constant 0 : index
    %362 = vector.load %arg7[%c0_146, %c0_147] : memref<1x256xf32, #tpu.memory_space<vmem>>, vector<1x256xf32>
    %363 = arith.addf %361, %362 : vector<1x256xf32>
    %364 = math.tanh %363 : vector<1x256xf32>
    %365 = vector.extract_strided_slice %364 {offsets = [0, 0], sizes = [1, 64], strides = [1, 1]} : vector<1x256xf32> to vector<1x64xf32>
    %cst_148 = arith.constant 5.000000e-01 : f32
    %366 = vector.broadcast %cst_148 : f32 to vector<1x64xf32>
    %367 = arith.mulf %366, %365 : vector<1x64xf32>
    %cst_149 = arith.constant 5.000000e-01 : f32
    %368 = vector.broadcast %cst_149 : f32 to vector<1x64xf32>
    %369 = arith.addf %367, %368 : vector<1x64xf32>
    %370 = vector.extract_strided_slice %364 {offsets = [0, 64], sizes = [1, 64], strides = [1, 1]} : vector<1x256xf32> to vector<1x64xf32>
    %cst_150 = arith.constant 5.000000e-01 : f32
    %371 = vector.broadcast %cst_150 : f32 to vector<1x64xf32>
    %372 = arith.mulf %371, %370 : vector<1x64xf32>
    %cst_151 = arith.constant 5.000000e-01 : f32
    %373 = vector.broadcast %cst_151 : f32 to vector<1x64xf32>
    %374 = arith.addf %372, %373 : vector<1x64xf32>
    %375 = vector.extract_strided_slice %364 {offsets = [0, 128], sizes = [1, 64], strides = [1, 1]} : vector<1x256xf32> to vector<1x64xf32>
    %376 = vector.extract_strided_slice %364 {offsets = [0, 192], sizes = [1, 64], strides = [1, 1]} : vector<1x256xf32> to vector<1x64xf32>
    %cst_152 = arith.constant 5.000000e-01 : f32
    %377 = vector.broadcast %cst_152 : f32 to vector<1x64xf32>
    %378 = arith.mulf %377, %376 : vector<1x64xf32>
    %cst_153 = arith.constant 5.000000e-01 : f32
    %379 = vector.broadcast %cst_153 : f32 to vector<1x64xf32>
    %380 = arith.addf %378, %379 : vector<1x64xf32>
    %381 = arith.mulf %374, %330 : vector<1x64xf32>
    %382 = arith.mulf %369, %375 : vector<1x64xf32>
    %383 = arith.addf %381, %382 : vector<1x64xf32>
    %384 = math.tanh %383 : vector<1x64xf32>
    %385 = arith.mulf %380, %384 : vector<1x64xf32>
    %386 = vector.extract_strided_slice %10 {offsets = [7, 0], sizes = [1, 256], strides = [1, 1]} : vector<8x256xf32> to vector<1x256xf32>
    %c0_154 = arith.constant 0 : index
    %c0_155 = arith.constant 0 : index
    %387 = vector.load %arg4[%c0_154, %c0_155] : memref<64x256xf32, #tpu.memory_space<vmem>>, vector<64x256xf32>
    %cst_156 = arith.constant dense<0.000000e+00> : vector<1x256xf32>
    %388 = tpu.matmul %358, %387, %cst_156 {dimension_numbers = #tpu.dot_dimension_numbers<[1], [0], [0], [1], [0, 0, 1, 1], [], []>} : vector<1x64xf32>, vector<64x256xf32>, vector<1x256xf32> -> vector<1x256xf32>
    %389 = arith.addf %386, %388 : vector<1x256xf32>
    %390 = math.tanh %389 : vector<1x256xf32>
    %391 = vector.extract_strided_slice %390 {offsets = [0, 0], sizes = [1, 64], strides = [1, 1]} : vector<1x256xf32> to vector<1x64xf32>
    %cst_157 = arith.constant 5.000000e-01 : f32
    %392 = vector.broadcast %cst_157 : f32 to vector<1x64xf32>
    %393 = arith.mulf %392, %391 : vector<1x64xf32>
    %cst_158 = arith.constant 5.000000e-01 : f32
    %394 = vector.broadcast %cst_158 : f32 to vector<1x64xf32>
    %395 = arith.addf %393, %394 : vector<1x64xf32>
    %396 = vector.extract_strided_slice %390 {offsets = [0, 64], sizes = [1, 64], strides = [1, 1]} : vector<1x256xf32> to vector<1x64xf32>
    %cst_159 = arith.constant 5.000000e-01 : f32
    %397 = vector.broadcast %cst_159 : f32 to vector<1x64xf32>
    %398 = arith.mulf %397, %396 : vector<1x64xf32>
    %cst_160 = arith.constant 5.000000e-01 : f32
    %399 = vector.broadcast %cst_160 : f32 to vector<1x64xf32>
    %400 = arith.addf %398, %399 : vector<1x64xf32>
    %401 = vector.extract_strided_slice %390 {offsets = [0, 128], sizes = [1, 64], strides = [1, 1]} : vector<1x256xf32> to vector<1x64xf32>
    %402 = vector.extract_strided_slice %390 {offsets = [0, 192], sizes = [1, 64], strides = [1, 1]} : vector<1x256xf32> to vector<1x64xf32>
    %cst_161 = arith.constant 5.000000e-01 : f32
    %403 = vector.broadcast %cst_161 : f32 to vector<1x64xf32>
    %404 = arith.mulf %403, %402 : vector<1x64xf32>
    %cst_162 = arith.constant 5.000000e-01 : f32
    %405 = vector.broadcast %cst_162 : f32 to vector<1x64xf32>
    %406 = arith.addf %404, %405 : vector<1x64xf32>
    %407 = arith.mulf %400, %356 : vector<1x64xf32>
    %408 = arith.mulf %395, %401 : vector<1x64xf32>
    %409 = arith.addf %407, %408 : vector<1x64xf32>
    %410 = math.tanh %409 : vector<1x64xf32>
    %411 = arith.mulf %406, %410 : vector<1x64xf32>
    %412 = tpu.concatenate %411, %385 in 1 : vector<1x64xf32>, vector<1x64xf32> -> vector<1x128xf32>
    %c0_163 = arith.constant 0 : index
    %c0_164 = arith.constant 0 : index
    %413 = vector.load %arg6[%c0_163, %c0_164] : memref<128x256xf32, #tpu.memory_space<vmem>>, vector<128x256xf32>
    %cst_165 = arith.constant dense<0.000000e+00> : vector<1x256xf32>
    %414 = tpu.matmul %412, %413, %cst_165 {dimension_numbers = #tpu.dot_dimension_numbers<[1], [0], [0], [1], [0, 0, 1, 1], [], []>} : vector<1x128xf32>, vector<128x256xf32>, vector<1x256xf32> -> vector<1x256xf32>
    %c0_166 = arith.constant 0 : index
    %c0_167 = arith.constant 0 : index
    %415 = vector.load %arg7[%c0_166, %c0_167] : memref<1x256xf32, #tpu.memory_space<vmem>>, vector<1x256xf32>
    %416 = arith.addf %414, %415 : vector<1x256xf32>
    %417 = math.tanh %416 : vector<1x256xf32>
    %418 = vector.extract_strided_slice %417 {offsets = [0, 0], sizes = [1, 64], strides = [1, 1]} : vector<1x256xf32> to vector<1x64xf32>
    %cst_168 = arith.constant 5.000000e-01 : f32
    %419 = vector.broadcast %cst_168 : f32 to vector<1x64xf32>
    %420 = arith.mulf %419, %418 : vector<1x64xf32>
    %cst_169 = arith.constant 5.000000e-01 : f32
    %421 = vector.broadcast %cst_169 : f32 to vector<1x64xf32>
    %422 = arith.addf %420, %421 : vector<1x64xf32>
    %423 = vector.extract_strided_slice %417 {offsets = [0, 64], sizes = [1, 64], strides = [1, 1]} : vector<1x256xf32> to vector<1x64xf32>
    %cst_170 = arith.constant 5.000000e-01 : f32
    %424 = vector.broadcast %cst_170 : f32 to vector<1x64xf32>
    %425 = arith.mulf %424, %423 : vector<1x64xf32>
    %cst_171 = arith.constant 5.000000e-01 : f32
    %426 = vector.broadcast %cst_171 : f32 to vector<1x64xf32>
    %427 = arith.addf %425, %426 : vector<1x64xf32>
    %428 = vector.extract_strided_slice %417 {offsets = [0, 128], sizes = [1, 64], strides = [1, 1]} : vector<1x256xf32> to vector<1x64xf32>
    %429 = vector.extract_strided_slice %417 {offsets = [0, 192], sizes = [1, 64], strides = [1, 1]} : vector<1x256xf32> to vector<1x64xf32>
    %cst_172 = arith.constant 5.000000e-01 : f32
    %430 = vector.broadcast %cst_172 : f32 to vector<1x64xf32>
    %431 = arith.mulf %430, %429 : vector<1x64xf32>
    %cst_173 = arith.constant 5.000000e-01 : f32
    %432 = vector.broadcast %cst_173 : f32 to vector<1x64xf32>
    %433 = arith.addf %431, %432 : vector<1x64xf32>
    %434 = arith.mulf %427, %383 : vector<1x64xf32>
    %435 = arith.mulf %422, %428 : vector<1x64xf32>
    %436 = arith.addf %434, %435 : vector<1x64xf32>
    %437 = math.tanh %436 : vector<1x64xf32>
    %438 = arith.mulf %433, %437 : vector<1x64xf32>
    %439 = tpu.concatenate %67, %120, %173, %226, %279, %332, %385, %438 in 0 : vector<1x64xf32>, vector<1x64xf32>, vector<1x64xf32>, vector<1x64xf32>, vector<1x64xf32>, vector<1x64xf32>, vector<1x64xf32>, vector<1x64xf32> -> vector<8x64xf32>
    %c0_174 = arith.constant 0 : index
    %c0_175 = arith.constant 0 : index
    %440 = vector.load %arg8[%c0_174, %c0_175] : memref<8x64xf32, #tpu.memory_space<vmem>>, vector<8x64xf32>
    tpu.vector_store %arg8[%c0_174, %c0_175], %439 {strides = array<i32>} : memref<8x64xf32, #tpu.memory_space<vmem>>, vector<8x64xf32>,
    return
  }
}

</mosaic_0001>

<llo_original>
// kernel: dynamics_forward.1
$region0: #{dynamics_forward.1}
  #allocation0 [shape = 'u32[]', space=smem, size = 0x4, offset = 0x4, fixed_abs, tag = 'smem constant byte address 0x4 - core index']
  #allocation1 [shape = 'u32[144,128]{1,0:T(1,128)}', space=vmem, size = 0x12000, scoped, tag = 'internal scratch']
  %s0 = inlined_call_operand.vmem [shape: f32[8,40], index: 0, kind: input, shape index: {}]
  %s1 = inlined_call_operand.hbm [shape: f32[40,64], index: 1, kind: input, shape index: {}]
  %s2 = inlined_call_operand.vmem [shape: f32[1,64], index: 2, kind: input, shape index: {}]
  %s3 = inlined_call_operand.hbm [shape: f32[64,256], index: 3, kind: input, shape index: {}]
  %s4 = inlined_call_operand.hbm [shape: f32[64,256], index: 4, kind: input, shape index: {}]
  %s5 = inlined_call_operand.vmem [shape: f32[1,256], index: 5, kind: input, shape index: {}]
  %s6 = inlined_call_operand.hbm [shape: f32[128,256], index: 6, kind: input, shape index: {}]
  %s7 = inlined_call_operand.vmem [shape: f32[1,256], index: 7, kind: input, shape index: {}]
  %s8 = inlined_call_operand.vmem [shape: f32[8,64], index: 8, kind: output, shape index: {}]
  %s9 = sld [smem:[#allocation0]]
  $region58: #{dynamics_forward.1} parent=0
    _
  %s11 = ssub.s32 1, %s9
  %s12 = scalar_select 0, %s11, %s9
  $region1: #{dynamics_forward.1} parent=0
    #allocation2 [shape = 'u8[20480]{0}', space=vmem, size = 0x5000, scoped, tag = 'input window, operand 1, single buffered']
    #allocation3 [shape = 's32[1]{0}', space=sflag, size = 0x4, scoped, tag = 'scoped memory for dynamics_forward.1']
    #allocation4 [shape = 'u8[65536]{0}', space=vmem, size = 0x10000, scoped, tag = 'input window, operand 3, single buffered']
    #allocation5 [shape = 's32[1]{0}', space=sflag, size = 0x4, scoped, tag = 'scoped memory for dynamics_forward.1']
    #allocation6 [shape = 'u8[65536]{0}', space=vmem, size = 0x10000, scoped, tag = 'input window, operand 4, single buffered']
    #allocation7 [shape = 'u8[131072]{0}', space=vmem, size = 0x20000, scoped, tag = 'input window, operand 6, single buffered']
    #allocation8 [shape = 's32[1]{0}', space=sflag, size = 0x4, scoped, tag = 'scoped memory for dynamics_forward.1']
    %13 = vsyncpa [#allocation3], 0
    %14 = vsyncpa [#allocation5], 0
    %15 = vsyncpa [#allocation8], 0
    // Predicated region
    $region2: #{dynamics_forward.1} parent=1 // pred_check
      _
    $region3: #{dynamics_forward.1} parent=1 // pred_check_branch
      %17 = sbr.rel (0) target = $region5
    $region4: #{dynamics_forward.1} parent=1 // pred_region
      _
    $region5: #{dynamics_forward.1} parent=1 // pred_fallthru
      _
    // Predicated region
    $region6: #{dynamics_forward.1} parent=1 // pred_check
      _
    $region7: #{dynamics_forward.1} parent=1 // pred_check_branch
      %19 = sbr.rel (0) target = $region9
    $region8: #{dynamics_forward.1} parent=1 // pred_region
      %s21 = ssub.s32 640, 640
      %22 = vsyncadd [#allocation3], %s21
      %s23 = sshll.u32 [#allocation2], 4
      %s24 = int_to_ptr.vmem [resolvable:$true] %s23
      %29 = dma.hbm_to_vmem [thread:$0]  %s1, 640, %s24, [#allocation3], 128, 128, 8
    $region9: #{dynamics_forward.1} parent=1 // pred_fallthru
      _
    // Predicated region
    $region10: #{dynamics_forward.1} parent=1 // pred_check
      _
    $region11: #{dynamics_forward.1} parent=1 // pred_check_branch
      %31 = sbr.rel (0) target = $region13
    $region12: #{dynamics_forward.1} parent=1 // pred_region
      _
    $region13: #{dynamics_forward.1} parent=1 // pred_fallthru
      _
    // Predicated region
    $region14: #{dynamics_forward.1} parent=1 // pred_check
      _
    $region15: #{dynamics_forward.1} parent=1 // pred_check_branch
      %33 = sbr.rel (0) target = $region17
    $region16: #{dynamics_forward.1} parent=1 // pred_region
      %s35 = ssub.s32 2048, 2048
      %36 = vsyncadd [#allocation5], %s35
      %s37 = sshll.u32 [#allocation4], 4
      %s38 = int_to_ptr.vmem [resolvable:$true] %s37
      %43 = dma.hbm_to_vmem [thread:$0]  %s3, 2048, %s38, [#allocation5], 256, 256, 16
    $region17: #{dynamics_forward.1} parent=1 // pred_fallthru
      _
    // Predicated region
    $region18: #{dynamics_forward.1} parent=1 // pred_check
      _
    $region19: #{dynamics_forward.1} parent=1 // pred_check_branch
      %45 = sbr.rel (0) target = $region21
    $region20: #{dynamics_forward.1} parent=1 // pred_region
      %s47 = ssub.s32 2048, 2048
      %48 = vsyncadd [#allocation5], %s47
      %s49 = sshll.u32 [#allocation6], 4
      %s50 = int_to_ptr.vmem [resolvable:$true] %s49
      %55 = dma.hbm_to_vmem [thread:$0]  %s4, 2048, %s50, [#allocation5], 256, 256, 16
    $region21: #{dynamics_forward.1} parent=1 // pred_fallthru
      _
    // Predicated region
    $region22: #{dynamics_forward.1} parent=1 // pred_check
      _
    $region23: #{dynamics_forward.1} parent=1 // pred_check_branch
      %57 = sbr.rel (0) target = $region25
    $region24: #{dynamics_forward.1} parent=1 // pred_region
      _
    $region25: #{dynamics_forward.1} parent=1 // pred_fallthru
      _
    // Predicated region
    $region26: #{dynamics_forward.1} parent=1 // pred_check
      _
    $region27: #{dynamics_forward.1} parent=1 // pred_check_branch
      %59 = sbr.rel (0) target = $region29
    $region28: #{dynamics_forward.1} parent=1 // pred_region
      %s61 = ssub.s32 4096, 4096
      %62 = vsyncadd [#allocation8], %s61
      %s63 = sshll.u32 [#allocation7], 4
      %s64 = int_to_ptr.vmem [resolvable:$true] %s63
      %69 = dma.hbm_to_vmem [thread:$0]  %s6, 4096, %s64, [#allocation8], 256, 256, 16
    $region29: #{dynamics_forward.1} parent=1 // pred_fallthru
      _
    // Predicated region
    $region30: #{dynamics_forward.1} parent=1 // pred_check
      _
    $region31: #{dynamics_forward.1} parent=1 // pred_check_branch
      %71 = sbr.rel (0) target = $region33
    $region32: #{dynamics_forward.1} parent=1 // pred_region
      _
    $region33: #{dynamics_forward.1} parent=1 // pred_fallthru
      _
    // Predicated region
    $region34: #{dynamics_forward.1} parent=1 // pred_check
      _
    $region35: #{dynamics_forward.1} parent=1 // pred_check_branch
      %73 = sbr.rel (0) target = $region37
    $region36: #{dynamics_forward.1} parent=1 // pred_region
      %74 = dma.done [#allocation3], 640
    $region37: #{dynamics_forward.1} parent=1 // pred_fallthru
      _
    // Predicated region
    $region38: #{dynamics_forward.1} parent=1 // pred_check
      _
    $region39: #{dynamics_forward.1} parent=1 // pred_check_branch
      %76 = sbr.rel (0) target = $region41
    $region40: #{dynamics_forward.1} parent=1 // pred_region
      %77 = dma.done [#allocation5], 2048
    $region41: #{dynamics_forward.1} parent=1 // pred_fallthru
      _
    // Predicated region
    $region42: #{dynamics_forward.1} parent=1 // pred_check
      _
    $region43: #{dynamics_forward.1} parent=1 // pred_check_branch
      %79 = sbr.rel (0) target = $region45
    $region44: #{dynamics_forward.1} parent=1 // pred_region
      %80 = dma.done [#allocation5], 2048
    $region45: #{dynamics_forward.1} parent=1 // pred_fallthru
      _
    // Predicated region
    $region46: #{dynamics_forward.1} parent=1 // pred_check
      _
    $region47: #{dynamics_forward.1} parent=1 // pred_check_branch
      %82 = sbr.rel (0) target = $region49
    $region48: #{dynamics_forward.1} parent=1 // pred_region
      %83 = dma.done [#allocation8], 4096
    $region49: #{dynamics_forward.1} parent=1 // pred_fallthru
      _
    %v84 = vld [vmem:[%s0] sm:$0xff]
    %v85 = vld [vmem:[#allocation2] sm:$0xff]
    %v86 = vld [vmem:[#allocation2 + $0x8] sm:$0xff]
    %v87 = vld [vmem:[#allocation2 + $0x10] sm:$0xff]
    %v88 = vld [vmem:[#allocation2 + $0x18] sm:$0xff]
    %v89 = vld [vmem:[#allocation2 + $0x20] sm:$0xff]
    %v90 = vld [vmem:[%s2] sm:$0x1]
    %v92 = vlaneseq
    %v93 = vshrl.u32 %v92, 7
    %v94 = vsub.s32 0, %v93
    %v95 = vrot.slane %v90, %v94
    %vm97 = vcmask 326656
    %v99 = vsel %vm97, %v84, 0
    %101 = vmatprep.subr.mxu0 0.0
    %102 = vmatpush1.msra.mxu0 0.0
    %103 = vmatprep.subr.mxu0 0.0
    %104 = vmatpush1.msra.mxu0 0.0
    %105 = vmatprep.subr.mxu0 0.0
    %106 = vmatpush1.msra.mxu0 0.0
    %107 = vmatprep.subr.mxu0 0.0
    %108 = vmatpush1.msra.mxu0 0.0
    %109 = vmatprep.subr.mxu0 0.0
    %110 = vmatpush1.msra.mxu0 0.0
    %111 = vmatprep.subr.mxu0 0.0
    %112 = vmatpush1.msra.mxu0 0.0
    %113 = vmatprep.subr.mxu0 0.0
    %114 = vmatpush1.msra.mxu0 0.0
    %115 = vmatprep.subr.mxu0 0.0
    %116 = vmatpush1.msra.mxu0 0.0
    %117 = vmatprep.subr.mxu0 0.0
    %118 = vmatpush1.msra.mxu0 0.0
    %119 = vmatprep.subr.mxu0 0.0
    %120 = vmatpush1.msra.mxu0 0.0
    %121 = vmatprep.subr.mxu0 0.0
    %122 = vmatpush1.msra.mxu0 0.0
    %123 = vmatprep.subr.mxu0 0.0
    %124 = vmatpush1.msra.mxu0 %v89
    %125 = vmatprep.subr.mxu0 0.0
    %126 = vmatpush1.msra.mxu0 %v88
    %127 = vmatprep.subr.mxu0 0.0
    %128 = vmatpush1.msra.mxu0 %v87
    %129 = vmatprep.subr.mxu0 0.0
    %130 = vmatpush1.msra.mxu0 %v86
    %131 = vmatprep.subr.mxu0 0.0
    %132 = vmatpush1.msra.mxu0 %v85
    %133 = vmatprep.subr.mxu0 0.0
    %134 = vmatpush2.msra.mxu0 0.0
    %135 = vmatprep.subr.mxu0 0.0
    %136 = vmatpush2.msra.mxu0 0.0
    %137 = vmatprep.subr.mxu0 0.0
    %138 = vmatpush2.msra.mxu0 0.0
    %139 = vmatprep.subr.mxu0 0.0
    %140 = vmatpush2.msra.mxu0 0.0
    %141 = vmatprep.subr.mxu0 0.0
    %142 = vmatpush2.msra.mxu0 0.0
    %143 = vmatprep.subr.mxu0 0.0
    %144 = vmatpush2.msra.mxu0 0.0
    %145 = vmatprep.subr.mxu0 0.0
    %146 = vmatpush2.msra.mxu0 0.0
    %147 = vmatprep.subr.mxu0 0.0
    %148 = vmatpush2.msra.mxu0 0.0
    %149 = vmatprep.subr.mxu0 0.0
    %150 = vmatpush2.msra.mxu0 0.0
    %151 = vmatprep.subr.mxu0 0.0
    %152 = vmatpush2.msra.mxu0 0.0
    %153 = vmatprep.subr.mxu0 0.0
    %154 = vmatpush2.msra.mxu0 0.0
    %155 = vmatprep.subr.mxu0 0.0
    %156 = vmatpush2.msra.mxu0 0.0
    %157 = vmatprep.subr.mxu0 0.0
    %158 = vmatpush2.msra.mxu0 0.0
    %159 = vmatprep.subr.mxu0 0.0
    %160 = vmatpush2.msra.mxu0 0.0
    %161 = vmatprep.subr.mxu0 0.0
    %162 = vmatpush2.msra.mxu0 0.0
    %163 = vmatprep.subr.mxu0 0.0
    %164 = vmatpush2.msra.mxu0 0.0
    %165 = vmatprep.mubr.f32.mxu0 0.0
    %166 = vmatmul.mubr.f32.gmra.mxu0 %v99
    %v167 = vpop.f32.mrf.mxu0
    %v168 = vadd.f32 %v95, %v167
    %v169 = vpop.f32.mrf.mxu0
    %170 = vdwg.mxu0
    %v171 = vld [vmem:[#allocation4] sm:$0xff]
    %v172 = vld [vmem:[#allocation4 + $0x8] sm:$0xff]
    %v173 = vld [vmem:[#allocation4 + $0x10] sm:$0xff]
    %v174 = vld [vmem:[#allocation4 + $0x18] sm:$0xff]
    %v175 = vld [vmem:[#allocation4 + $0x20] sm:$0xff]
    %v176 = vld [vmem:[#allocation4 + $0x28] sm:$0xff]
    %v177 = vld [vmem:[#allocation4 + $0x30] sm:$0xff]
    %v178 = vld [vmem:[#allocation4 + $0x38] sm:$0xff]
    %v179 = vld [vmem:[#allocation4 + $0x40] sm:$0xff]
    %v180 = vld [vmem:[#allocation4 + $0x48] sm:$0xff]
    %v181 = vld [vmem:[#allocation4 + $0x50] sm:$0xff]
    %v182 = vld [vmem:[#allocation4 + $0x58] sm:$0xff]
    %v183 = vld [vmem:[#allocation4 + $0x60] sm:$0xff]
    %v184 = vld [vmem:[#allocation4 + $0x68] sm:$0xff]
    %v185 = vld [vmem:[#allocation4 + $0x70] sm:$0xff]
    %v186 = vld [vmem:[#allocation4 + $0x78] sm:$0xff]
    %v187 = vld [vmem:[%s5] sm:$0x3]
    %v189 = vlaneseq
    %v190 = vshrl.u32 %v189, 7
    %v191 = vsub.s32 0, %v190
    %v192 = vrot.slane %v187, %v191
    %v193 = vlaneseq
    %v194 = vshrl.u32 %v193, 7
    %v195 = vsub.s32 1, %v194
    %v196 = vrot.slane %v187, %v195
    %vm199 = vcmask 523264
    %v201 = vsel %vm199, %v168, 0
    %203 = vmatprep.subr.mxu0 0.0
    %204 = vmatpush1.msra.mxu0 0.0
    %205 = vmatprep.subr.mxu0 0.0
    %206 = vmatpush1.msra.mxu0 0.0
    %207 = vmatprep.subr.mxu0 0.0
    %208 = vmatpush1.msra.mxu0 0.0
    %209 = vmatprep.subr.mxu0 0.0
    %210 = vmatpush1.msra.mxu0 0.0
    %211 = vmatprep.subr.mxu0 0.0
    %212 = vmatpush1.msra.mxu0 0.0
    %213 = vmatprep.subr.mxu0 0.0
    %214 = vmatpush1.msra.mxu0 0.0
    %215 = vmatprep.subr.mxu0 0.0
    %216 = vmatpush1.msra.mxu0 0.0
    %217 = vmatprep.subr.mxu0 0.0
    %218 = vmatpush1.msra.mxu0 0.0
    %219 = vmatprep.subr.mxu0 %v186
    %220 = vmatpush1.msra.mxu0 %v185
    %221 = vmatprep.subr.mxu0 %v184
    %222 = vmatpush1.msra.mxu0 %v183
    %223 = vmatprep.subr.mxu0 %v182
    %224 = vmatpush1.msra.mxu0 %v181
    %225 = vmatprep.subr.mxu0 %v180
    %226 = vmatpush1.msra.mxu0 %v179
    %227 = vmatprep.subr.mxu0 %v178
    %228 = vmatpush1.msra.mxu0 %v177
    %229 = vmatprep.subr.mxu0 %v176
    %230 = vmatpush1.msra.mxu0 %v175
    %231 = vmatprep.subr.mxu0 %v174
    %232 = vmatpush1.msra.mxu0 %v173
    %233 = vmatprep.subr.mxu0 %v172
    %234 = vmatpush1.msra.mxu0 %v171
    %235 = vmatprep.subr.mxu0 0.0
    %236 = vmatpush2.msra.mxu0 0.0
    %237 = vmatprep.subr.mxu0 0.0
    %238 = vmatpush2.msra.mxu0 0.0
    %239 = vmatprep.subr.mxu0 0.0
    %240 = vmatpush2.msra.mxu0 0.0
    %241 = vmatprep.subr.mxu0 0.0
    %242 = vmatpush2.msra.mxu0 0.0
    %243 = vmatprep.subr.mxu0 0.0
    %244 = vmatpush2.msra.mxu0 0.0
    %245 = vmatprep.subr.mxu0 0.0
    %246 = vmatpush2.msra.mxu0 0.0
    %247 = vmatprep.subr.mxu0 0.0
    %248 = vmatpush2.msra.mxu0 0.0
    %249 = vmatprep.subr.mxu0 0.0
    %250 = vmatpush2.msra.mxu0 0.0
    %251 = vmatprep.subr.mxu0 0.0
    %252 = vmatpush2.msra.mxu0 0.0
    %253 = vmatprep.subr.mxu0 0.0
    %254 = vmatpush2.msra.mxu0 0.0
    %255 = vmatprep.subr.mxu0 0.0
    %256 = vmatpush2.msra.mxu0 0.0
    %257 = vmatprep.subr.mxu0 0.0
    %258 = vmatpush2.msra.mxu0 0.0
    %259 = vmatprep.subr.mxu0 0.0
    %260 = vmatpush2.msra.mxu0 0.0
    %261 = vmatprep.subr.mxu0 0.0
    %262 = vmatpush2.msra.mxu0 0.0
    %263 = vmatprep.subr.mxu0 0.0
    %264 = vmatpush2.msra.mxu0 0.0
    %265 = vmatprep.subr.mxu0 0.0
    %266 = vmatpush2.msra.mxu0 0.0
    %267 = vmatprep.mubr.f32.mxu0 0.0
    %268 = vmatmul.mubr.f32.gmra.mxu0 %v201
    %v269 = vpop.f32.mrf.mxu0
    %v270 = vadd.f32 %v192, %v269
    %v271 = vpop.f32.mrf.mxu0
    %v272 = vadd.f32 %v196, %v271
    %273 = vdwg.mxu0
    %v274 = vld [vmem:[#allocation6] sm:$0xff]
    %v275 = vld [vmem:[#allocation6 + $0x8] sm:$0xff]
    %v276 = vld [vmem:[#allocation6 + $0x10] sm:$0xff]
    %v277 = vld [vmem:[#allocation6 + $0x18] sm:$0xff]
    %v278 = vld [vmem:[#allocation6 + $0x20] sm:$0xff]
    %v279 = vld [vmem:[#allocation6 + $0x28] sm:$0xff]
    %v280 = vld [vmem:[#allocation6 + $0x30] sm:$0xff]
    %v281 = vld [vmem:[#allocation6 + $0x38] sm:$0xff]
    %v282 = vld [vmem:[#allocation6 + $0x40] sm:$0xff]
    %v283 = vld [vmem:[#allocation6 + $0x48] sm:$0xff]
    %v284 = vld [vmem:[#allocation6 + $0x50] sm:$0xff]
    %v285 = vld [vmem:[#allocation6 + $0x58] sm:$0xff]
    %v286 = vld [vmem:[#allocation6 + $0x60] sm:$0xff]
    %v287 = vld [vmem:[#allocation6 + $0x68] sm:$0xff]
    %v288 = vld [vmem:[#allocation6 + $0x70] sm:$0xff]
    %v289 = vld [vmem:[#allocation6 + $0x78] sm:$0xff]
    %v291 = vsel %vm199, 0.0, 0
    %293 = vmatprep.subr.mxu0 0.0
    %294 = vmatpush1.msra.mxu0 0.0
    %295 = vmatprep.subr.mxu0 0.0
    %296 = vmatpush1.msra.mxu0 0.0
    %297 = vmatprep.subr.mxu0 0.0
    %298 = vmatpush1.msra.mxu0 0.0
    %299 = vmatprep.subr.mxu0 0.0
    %300 = vmatpush1.msra.mxu0 0.0
    %301 = vmatprep.subr.mxu0 0.0
    %302 = vmatpush1.msra.mxu0 0.0
    %303 = vmatprep.subr.mxu0 0.0
    %304 = vmatpush1.msra.mxu0 0.0
    %305 = vmatprep.subr.mxu0 0.0
    %306 = vmatpush1.msra.mxu0 0.0
    %307 = vmatprep.subr.mxu0 0.0
    %308 = vmatpush1.msra.mxu0 0.0
    %309 = vmatprep.subr.mxu0 %v289
    %310 = vmatpush1.msra.mxu0 %v288
    %311 = vmatprep.subr.mxu0 %v287
    %312 = vmatpush1.msra.mxu0 %v286
    %313 = vmatprep.subr.mxu0 %v285
    %314 = vmatpush1.msra.mxu0 %v284
    %315 = vmatprep.subr.mxu0 %v283
    %316 = vmatpush1.msra.mxu0 %v282
    %317 = vmatprep.subr.mxu0 %v281
    %318 = vmatpush1.msra.mxu0 %v280
    %319 = vmatprep.subr.mxu0 %v279
    %320 = vmatpush1.msra.mxu0 %v278
    %321 = vmatprep.subr.mxu0 %v277
    %322 = vmatpush1.msra.mxu0 %v276
    %323 = vmatprep.subr.mxu0 %v275
    %324 = vmatpush1.msra.mxu0 %v274
    %325 = vmatprep.subr.mxu0 0.0
    %326 = vmatpush2.msra.mxu0 0.0
    %327 = vmatprep.subr.mxu0 0.0
    %328 = vmatpush2.msra.mxu0 0.0
    %329 = vmatprep.subr.mxu0 0.0
    %330 = vmatpush2.msra.mxu0 0.0
    %331 = vmatprep.subr.mxu0 0.0
    %332 = vmatpush2.msra.mxu0 0.0
    %333 = vmatprep.subr.mxu0 0.0
    %334 = vmatpush2.msra.mxu0 0.0
    %335 = vmatprep.subr.mxu0 0.0
    %336 = vmatpush2.msra.mxu0 0.0
    %337 = vmatprep.subr.mxu0 0.0
    %338 = vmatpush2.msra.mxu0 0.0
    %339 = vmatprep.subr.mxu0 0.0
    %340 = vmatpush2.msra.mxu0 0.0
    %341 = vmatprep.subr.mxu0 0.0
    %342 = vmatpush2.msra.mxu0 0.0
    %343 = vmatprep.subr.mxu0 0.0
    %344 = vmatpush2.msra.mxu0 0.0
    %345 = vmatprep.subr.mxu0 0.0
    %346 = vmatpush2.msra.mxu0 0.0
    %347 = vmatprep.subr.mxu0 0.0
    %348 = vmatpush2.msra.mxu0 0.0
    %349 = vmatprep.subr.mxu0 0.0
    %350 = vmatpush2.msra.mxu0 0.0
    %351 = vmatprep.subr.mxu0 0.0
    %352 = vmatpush2.msra.mxu0 0.0
    %353 = vmatprep.subr.mxu0 0.0
    %354 = vmatpush2.msra.mxu0 0.0
    %355 = vmatprep.subr.mxu0 0.0
    %356 = vmatpush2.msra.mxu0 0.0
    %357 = vmatprep.mubr.f32.mxu0 0.0
    %358 = vmatmul.mubr.f32.gmra.mxu0 %v291
    %v359 = vpop.f32.mrf.mxu0
    %v360 = vadd.f32 0.0, %v359
    %v361 = vpop.f32.mrf.mxu0
    %v362 = vadd.f32 0.0, %v361
    %363 = vdwg.mxu0
    %v364 = vadd.f32 %v270, %v360
    %v365 = vadd.f32 %v272, %v362
    %v366 = vtanh.pop %v364
    %v367 = vtanh.pop %v365
    %v368 = vmul.f32 %v366, 0.5
    %v369 = vadd.f32 %v368, 0.5
    %v370 = vmul.f32 %v367, 0.5
    %v371 = vadd.f32 %v370, 0.5
    %v372 = vmul.f32 %v369, 0.0
    %v373 = vmul.f32 %v369, %v367
    %375 = vrot.lane.b32.xlu0 %v373, 64
    %v376 = vpop.permute.xlu0 %375
    %v378 = vadd.f32 %v372, %v376
    %v379 = vtanh.pop %v378
    %v380 = vmul.f32 %v371, %v379
    %382 = vrot.lane.b32.xlu0 %v380, 64
    %v383 = vpop.permute.xlu0 %382
    %v385 = vsel %vm199, %v383, 0.0
    %v386 = vld [vmem:[#allocation7] sm:$0xff]
    %v387 = vld [vmem:[#allocation7 + $0x8] sm:$0xff]
    %v388 = vld [vmem:[#allocation7 + $0x10] sm:$0xff]
    %v389 = vld [vmem:[#allocation7 + $0x18] sm:$0xff]
    %v390 = vld [vmem:[#allocation7 + $0x20] sm:$0xff]
    %v391 = vld [vmem:[#allocation7 + $0x28] sm:$0xff]
    %v392 = vld [vmem:[#allocation7 + $0x30] sm:$0xff]
    %v393 = vld [vmem:[#allocation7 + $0x38] sm:$0xff]
    %v394 = vld [vmem:[#allocation7 + $0x40] sm:$0xff]
    %v395 = vld [vmem:[#allocation7 + $0x48] sm:$0xff]
    %v396 = vld [vmem:[#allocation7 + $0x50] sm:$0xff]
    %v397 = vld [vmem:[#allocation7 + $0x58] sm:$0xff]
    %v398 = vld [vmem:[#allocation7 + $0x60] sm:$0xff]
    %v399 = vld [vmem:[#allocation7 + $0x68] sm:$0xff]
    %v400 = vld [vmem:[#allocation7 + $0x70] sm:$0xff]
    %v401 = vld [vmem:[#allocation7 + $0x78] sm:$0xff]
    %v402 = vld [vmem:[#allocation7 + $0x80] sm:$0xff]
    %v403 = vld [vmem:[#allocation7 + $0x88] sm:$0xff]
    %v404 = vld [vmem:[#allocation7 + $0x90] sm:$0xff]
    %v405 = vld [vmem:[#allocation7 + $0x98] sm:$0xff]
    %v406 = vld [vmem:[#allocation7 + $0xa0] sm:$0xff]
    %v407 = vld [vmem:[#allocation7 + $0xa8] sm:$0xff]
    %v408 = vld [vmem:[#allocation7 + $0xb0] sm:$0xff]
    %v409 = vld [vmem:[#allocation7 + $0xb8] sm:$0xff]
    %v410 = vld [vmem:[#allocation7 + $0xc0] sm:$0xff]
    %v411 = vld [vmem:[#allocation7 + $0xc8] sm:$0xff]
    %v412 = vld [vmem:[#allocation7 + $0xd0] sm:$0xff]
    %v413 = vld [vmem:[#allocation7 + $0xd8] sm:$0xff]
    %v414 = vld [vmem:[#allocation7 + $0xe0] sm:$0xff]
    %v415 = vld [vmem:[#allocation7 + $0xe8] sm:$0xff]
    %v416 = vld [vmem:[#allocation7 + $0xf0] sm:$0xff]
    %v417 = vld [vmem:[#allocation7 + $0xf8] sm:$0xff]
    %v418 = vld [vmem:[%s7] sm:$0x3]
    %v420 = vlaneseq
    %v421 = vshrl.u32 %v420, 7
    %v422 = vsub.s32 0, %v421
    %v423 = vrot.slane %v418, %v422
    %v424 = vlaneseq
    %v425 = vshrl.u32 %v424, 7
    %v426 = vsub.s32 1, %v425
    %v427 = vrot.slane %v418, %v426
    %430 = vmatprep.subr.mxu0 %v417
    %431 = vmatpush1.msra.mxu0 %v416
    %432 = vmatprep.subr.mxu0 %v415
    %433 = vmatpush1.msra.mxu0 %v414
    %434 = vmatprep.subr.mxu0 %v413
    %435 = vmatpush1.msra.mxu0 %v412
    %436 = vmatprep.subr.mxu0 %v411
    %437 = vmatpush1.msra.mxu0 %v410
    %438 = vmatprep.subr.mxu0 %v409
    %439 = vmatpush1.msra.mxu0 %v408
    %440 = vmatprep.subr.mxu0 %v407
    %441 = vmatpush1.msra.mxu0 %v406
    %442 = vmatprep.subr.mxu0 %v405
    %443 = vmatpush1.msra.mxu0 %v404
    %444 = vmatprep.subr.mxu0 %v403
    %445 = vmatpush1.msra.mxu0 %v402
    %446 = vmatprep.subr.mxu0 %v401
    %447 = vmatpush1.msra.mxu0 %v400
    %448 = vmatprep.subr.mxu0 %v399
    %449 = vmatpush1.msra.mxu0 %v398
    %450 = vmatprep.subr.mxu0 %v397
    %451 = vmatpush1.msra.mxu0 %v396
    %452 = vmatprep.subr.mxu0 %v395
    %453 = vmatpush1.msra.mxu0 %v394
    %454 = vmatprep.subr.mxu0 %v393
    %455 = vmatpush1.msra.mxu0 %v392
    %456 = vmatprep.subr.mxu0 %v391
    %457 = vmatpush1.msra.mxu0 %v390
    %458 = vmatprep.subr.mxu0 %v389
    %459 = vmatpush1.msra.mxu0 %v388
    %460 = vmatprep.subr.mxu0 %v387
    %461 = vmatpush1.msra.mxu0 %v386
    %462 = vmatprep.subr.mxu0 0.0
    %463 = vmatpush2.msra.mxu0 0.0
    %464 = vmatprep.subr.mxu0 0.0
    %465 = vmatpush2.msra.mxu0 0.0
    %466 = vmatprep.subr.mxu0 0.0
    %467 = vmatpush2.msra.mxu0 0.0
    %468 = vmatprep.subr.mxu0 0.0
    %469 = vmatpush2.msra.mxu0 0.0
    %470 = vmatprep.subr.mxu0 0.0
    %471 = vmatpush2.msra.mxu0 0.0
    %472 = vmatprep.subr.mxu0 0.0
    %473 = vmatpush2.msra.mxu0 0.0
    %474 = vmatprep.subr.mxu0 0.0
    %475 = vmatpush2.msra.mxu0 0.0
    %476 = vmatprep.subr.mxu0 0.0
    %477 = vmatpush2.msra.mxu0 0.0
    %478 = vmatprep.subr.mxu0 0.0
    %479 = vmatpush2.msra.mxu0 0.0
    %480 = vmatprep.subr.mxu0 0.0
    %481 = vmatpush2.msra.mxu0 0.0
    %482 = vmatprep.subr.mxu0 0.0
    %483 = vmatpush2.msra.mxu0 0.0
    %484 = vmatprep.subr.mxu0 0.0
    %485 = vmatpush2.msra.mxu0 0.0
    %486 = vmatprep.subr.mxu0 0.0
    %487 = vmatpush2.msra.mxu0 0.0
    %488 = vmatprep.subr.mxu0 0.0
    %489 = vmatpush2.msra.mxu0 0.0
    %490 = vmatprep.subr.mxu0 0.0
    %491 = vmatpush2.msra.mxu0 0.0
    %492 = vmatprep.subr.mxu0 0.0
    %493 = vmatpush2.msra.mxu0 0.0
    %494 = vmatprep.mubr.f32.mxu0 0.0
    %495 = vmatmul.mubr.f32.gmra.mxu0 %v385
    %v496 = vpop.f32.mrf.mxu0
    %v497 = vadd.f32 %v423, %v496
    %v498 = vpop.f32.mrf.mxu0
    %v499 = vadd.f32 %v427, %v498
    %500 = vdwg.mxu0
    %v501 = vtanh.pop %v497
    %v502 = vtanh.pop %v499
    %v503 = vmul.f32 %v501, 0.5
    %v504 = vadd.f32 %v503, 0.5
    %v505 = vmul.f32 %v502, 0.5
    %v506 = vadd.f32 %v505, 0.5
    %v507 = vmul.f32 %v504, 0.0
    %v508 = vmul.f32 %v504, %v502
    %510 = vrot.lane.b32.xlu0 %v508, 64
    %v511 = vpop.permute.xlu0 %510
    %v513 = vadd.f32 %v507, %v511
    %v514 = vtanh.pop %v513
    %v515 = vmul.f32 %v506, %v514
    %v516 = vsel %vm199, %v383, 0
    %518 = vmatprep.subr.mxu0 0.0
    %519 = vmatpush1.msra.mxu0 0.0
    %520 = vmatprep.subr.mxu0 0.0
    %521 = vmatpush1.msra.mxu0 0.0
    %522 = vmatprep.subr.mxu0 0.0
    %523 = vmatpush1.msra.mxu0 0.0
    %524 = vmatprep.subr.mxu0 0.0
    %525 = vmatpush1.msra.mxu0 0.0
    %526 = vmatprep.subr.mxu0 0.0
    %527 = vmatpush1.msra.mxu0 0.0
    %528 = vmatprep.subr.mxu0 0.0
    %529 = vmatpush1.msra.mxu0 0.0
    %530 = vmatprep.subr.mxu0 0.0
    %531 = vmatpush1.msra.mxu0 0.0
    %532 = vmatprep.subr.mxu0 0.0
    %533 = vmatpush1.msra.mxu0 0.0
    %534 = vmatprep.subr.mxu0 %v289
    %535 = vmatpush1.msra.mxu0 %v288
    %536 = vmatprep.subr.mxu0 %v287
    %537 = vmatpush1.msra.mxu0 %v286
    %538 = vmatprep.subr.mxu0 %v285
    %539 = vmatpush1.msra.mxu0 %v284
    %540 = vmatprep.subr.mxu0 %v283
    %541 = vmatpush1.msra.mxu0 %v282
    %542 = vmatprep.subr.mxu0 %v281
    %543 = vmatpush1.msra.mxu0 %v280
    %544 = vmatprep.subr.mxu0 %v279
    %545 = vmatpush1.msra.mxu0 %v278
    %546 = vmatprep.subr.mxu0 %v277
    %547 = vmatpush1.msra.mxu0 %v276
    %548 = vmatprep.subr.mxu0 %v275
    %549 = vmatpush1.msra.mxu0 %v274
    %550 = vmatprep.subr.mxu0 0.0
    %551 = vmatpush2.msra.mxu0 0.0
    %552 = vmatprep.subr.mxu0 0.0
    %553 = vmatpush2.msra.mxu0 0.0
    %554 = vmatprep.subr.mxu0 0.0
    %555 = vmatpush2.msra.mxu0 0.0
    %556 = vmatprep.subr.mxu0 0.0
    %557 = vmatpush2.msra.mxu0 0.0
    %558 = vmatprep.subr.mxu0 0.0
    %559 = vmatpush2.msra.mxu0 0.0
    %560 = vmatprep.subr.mxu0 0.0
    %561 = vmatpush2.msra.mxu0 0.0
    %562 = vmatprep.subr.mxu0 0.0
    %563 = vmatpush2.msra.mxu0 0.0
    %564 = vmatprep.subr.mxu0 0.0
    %565 = vmatpush2.msra.mxu0 0.0
    %566 = vmatprep.subr.mxu0 0.0
    %567 = vmatpush2.msra.mxu0 0.0
    %568 = vmatprep.subr.mxu0 0.0
    %569 = vmatpush2.msra.mxu0 0.0
    %570 = vmatprep.subr.mxu0 0.0
    %571 = vmatpush2.msra.mxu0 0.0
    %572 = vmatprep.subr.mxu0 0.0
    %573 = vmatpush2.msra.mxu0 0.0
    %574 = vmatprep.subr.mxu0 0.0
    %575 = vmatpush2.msra.mxu0 0.0
    %576 = vmatprep.subr.mxu0 0.0
    %577 = vmatpush2.msra.mxu0 0.0
    %578 = vmatprep.subr.mxu0 0.0
    %579 = vmatpush2.msra.mxu0 0.0
    %580 = vmatprep.subr.mxu0 0.0
    %581 = vmatpush2.msra.mxu0 0.0
    %582 = vmatprep.mubr.f32.mxu0 0.0
    %583 = vmatmul.mubr.f32.gmra.mxu0 %v516
    %v584 = vpop.f32.mrf.mxu0
    %v585 = vadd.f32 0.0, %v584
    %v586 = vpop.f32.mrf.mxu0
    %v587 = vadd.f32 0.0, %v586
    %588 = vdwg.mxu0
    %v591 = vrot.slane %v585, 7
    %v592 = vrot.slane %v587, 7
    %v595 = vadd.f32 %v270, %v591
    %v596 = vadd.f32 %v272, %v592
    %v597 = vtanh.pop %v595
    %v598 = vtanh.pop %v596
    %v599 = vmul.f32 %v597, 0.5
    %v600 = vadd.f32 %v599, 0.5
    %v601 = vmul.f32 %v598, 0.5
    %v602 = vadd.f32 %v601, 0.5
    %v604 = vrot.slane %v378, 7
    %v606 = vmul.f32 %v600, %v604
    %v607 = vmul.f32 %v600, %v598
    %609 = vrot.lane.b32.xlu0 %v607, 64
    %v610 = vpop.permute.xlu0 %609
    %v612 = vadd.f32 %v606, %v610
    %v613 = vtanh.pop %v612
    %v614 = vmul.f32 %v602, %v613
    %616 = vrot.lane.b32.xlu0 %v614, 64
    %v617 = vpop.permute.xlu0 %616
    %v620 = vrot.slane %v515, 7
    %v622 = vsel %vm199, %v617, %v620
    %v624 = vrot.slane %v622, 1
    %626 = vmatprep.subr.mxu0 %v417
    %627 = vmatpush1.msra.mxu0 %v416
    %628 = vmatprep.subr.mxu0 %v415
    %629 = vmatpush1.msra.mxu0 %v414
    %630 = vmatprep.subr.mxu0 %v413
    %631 = vmatpush1.msra.mxu0 %v412
    %632 = vmatprep.subr.mxu0 %v411
    %633 = vmatpush1.msra.mxu0 %v410
    %634 = vmatprep.subr.mxu0 %v409
    %635 = vmatpush1.msra.mxu0 %v408
    %636 = vmatprep.subr.mxu0 %v407
    %637 = vmatpush1.msra.mxu0 %v406
    %638 = vmatprep.subr.mxu0 %v405
    %639 = vmatpush1.msra.mxu0 %v404
    %640 = vmatprep.subr.mxu0 %v403
    %641 = vmatpush1.msra.mxu0 %v402
    %642 = vmatprep.subr.mxu0 %v401
    %643 = vmatpush1.msra.mxu0 %v400
    %644 = vmatprep.subr.mxu0 %v399
    %645 = vmatpush1.msra.mxu0 %v398
    %646 = vmatprep.subr.mxu0 %v397
    %647 = vmatpush1.msra.mxu0 %v396
    %648 = vmatprep.subr.mxu0 %v395
    %649 = vmatpush1.msra.mxu0 %v394
    %650 = vmatprep.subr.mxu0 %v393
    %651 = vmatpush1.msra.mxu0 %v392
    %652 = vmatprep.subr.mxu0 %v391
    %653 = vmatpush1.msra.mxu0 %v390
    %654 = vmatprep.subr.mxu0 %v389
    %655 = vmatpush1.msra.mxu0 %v388
    %656 = vmatprep.subr.mxu0 %v387
    %657 = vmatpush1.msra.mxu0 %v386
    %658 = vmatprep.subr.mxu0 0.0
    %659 = vmatpush2.msra.mxu0 0.0
    %660 = vmatprep.subr.mxu0 0.0
    %661 = vmatpush2.msra.mxu0 0.0
    %662 = vmatprep.subr.mxu0 0.0
    %663 = vmatpush2.msra.mxu0 0.0
    %664 = vmatprep.subr.mxu0 0.0
    %665 = vmatpush2.msra.mxu0 0.0
    %666 = vmatprep.subr.mxu0 0.0
    %667 = vmatpush2.msra.mxu0 0.0
    %668 = vmatprep.subr.mxu0 0.0
    %669 = vmatpush2.msra.mxu0 0.0
    %670 = vmatprep.subr.mxu0 0.0
    %671 = vmatpush2.msra.mxu0 0.0
    %672 = vmatprep.subr.mxu0 0.0
    %673 = vmatpush2.msra.mxu0 0.0
    %674 = vmatprep.subr.mxu0 0.0
    %675 = vmatpush2.msra.mxu0 0.0
    %676 = vmatprep.subr.mxu0 0.0
    %677 = vmatpush2.msra.mxu0 0.0
    %678 = vmatprep.subr.mxu0 0.0
    %679 = vmatpush2.msra.mxu0 0.0
    %680 = vmatprep.subr.mxu0 0.0
    %681 = vmatpush2.msra.mxu0 0.0
    %682 = vmatprep.subr.mxu0 0.0
    %683 = vmatpush2.msra.mxu0 0.0
    %684 = vmatprep.subr.mxu0 0.0
    %685 = vmatpush2.msra.mxu0 0.0
    %686 = vmatprep.subr.mxu0 0.0
    %687 = vmatpush2.msra.mxu0 0.0
    %688 = vmatprep.subr.mxu0 0.0
    %689 = vmatpush2.msra.mxu0 0.0
    %690 = vmatprep.mubr.f32.mxu0 0.0
    %691 = vmatmul.mubr.f32.gmra.mxu0 %v624
    %v692 = vpop.f32.mrf.mxu0
    %v693 = vadd.f32 %v423, %v692
    %v694 = vpop.f32.mrf.mxu0
    %v695 = vadd.f32 %v427, %v694
    %696 = vdwg.mxu0
    %v697 = vtanh.pop %v693
    %v698 = vtanh.pop %v695
    %v699 = vmul.f32 %v697, 0.5
    %v700 = vadd.f32 %v699, 0.5
    %v701 = vmul.f32 %v698, 0.5
    %v702 = vadd.f32 %v701, 0.5
    %v703 = vmul.f32 %v700, %v513
    %v704 = vmul.f32 %v700, %v698
    %706 = vrot.lane.b32.xlu0 %v704, 64
    %v707 = vpop.permute.xlu0 %706
    %v709 = vadd.f32 %v703, %v707
    %v710 = vtanh.pop %v709
    %v711 = vmul.f32 %v702, %v710
    %v712 = vrot.slane %v614, 1
    %713 = vrot.lane.b32.xlu0 %v712, 64
    %v714 = vpop.permute.xlu0 %713
    %v715 = vsel %vm199, %v714, 0
    %717 = vmatprep.subr.mxu0 0.0
    %718 = vmatpush1.msra.mxu0 0.0
    %719 = vmatprep.subr.mxu0 0.0
    %720 = vmatpush1.msra.mxu0 0.0
    %721 = vmatprep.subr.mxu0 0.0
    %722 = vmatpush1.msra.mxu0 0.0
    %723 = vmatprep.subr.mxu0 0.0
    %724 = vmatpush1.msra.mxu0 0.0
    %725 = vmatprep.subr.mxu0 0.0
    %726 = vmatpush1.msra.mxu0 0.0
    %727 = vmatprep.subr.mxu0 0.0
    %728 = vmatpush1.msra.mxu0 0.0
    %729 = vmatprep.subr.mxu0 0.0
    %730 = vmatpush1.msra.mxu0 0.0
    %731 = vmatprep.subr.mxu0 0.0
    %732 = vmatpush1.msra.mxu0 0.0
    %733 = vmatprep.subr.mxu0 %v289
    %734 = vmatpush1.msra.mxu0 %v288
    %735 = vmatprep.subr.mxu0 %v287
    %736 = vmatpush1.msra.mxu0 %v286
    %737 = vmatprep.subr.mxu0 %v285
    %738 = vmatpush1.msra.mxu0 %v284
    %739 = vmatprep.subr.mxu0 %v283
    %740 = vmatpush1.msra.mxu0 %v282
    %741 = vmatprep.subr.mxu0 %v281
    %742 = vmatpush1.msra.mxu0 %v280
    %743 = vmatprep.subr.mxu0 %v279
    %744 = vmatpush1.msra.mxu0 %v278
    %745 = vmatprep.subr.mxu0 %v277
    %746 = vmatpush1.msra.mxu0 %v276
    %747 = vmatprep.subr.mxu0 %v275
    %748 = vmatpush1.msra.mxu0 %v274
    %749 = vmatprep.subr.mxu0 0.0
    %750 = vmatpush2.msra.mxu0 0.0
    %751 = vmatprep.subr.mxu0 0.0
    %752 = vmatpush2.msra.mxu0 0.0
    %753 = vmatprep.subr.mxu0 0.0
    %754 = vmatpush2.msra.mxu0 0.0
    %755 = vmatprep.subr.mxu0 0.0
    %756 = vmatpush2.msra.mxu0 0.0
    %757 = vmatprep.subr.mxu0 0.0
    %758 = vmatpush2.msra.mxu0 0.0
    %759 = vmatprep.subr.mxu0 0.0
    %760 = vmatpush2.msra.mxu0 0.0
    %761 = vmatprep.subr.mxu0 0.0
    %762 = vmatpush2.msra.mxu0 0.0
    %763 = vmatprep.subr.mxu0 0.0
    %764 = vmatpush2.msra.mxu0 0.0
    %765 = vmatprep.subr.mxu0 0.0
    %766 = vmatpush2.msra.mxu0 0.0
    %767 = vmatprep.subr.mxu0 0.0
    %768 = vmatpush2.msra.mxu0 0.0
    %769 = vmatprep.subr.mxu0 0.0
    %770 = vmatpush2.msra.mxu0 0.0
    %771 = vmatprep.subr.mxu0 0.0
    %772 = vmatpush2.msra.mxu0 0.0
    %773 = vmatprep.subr.mxu0 0.0
    %774 = vmatpush2.msra.mxu0 0.0
    %775 = vmatprep.subr.mxu0 0.0
    %776 = vmatpush2.msra.mxu0 0.0
    %777 = vmatprep.subr.mxu0 0.0
    %778 = vmatpush2.msra.mxu0 0.0
    %779 = vmatprep.subr.mxu0 0.0
    %780 = vmatpush2.msra.mxu0 0.0
    %781 = vmatprep.mubr.f32.mxu0 0.0
    %782 = vmatmul.mubr.f32.gmra.mxu0 %v715
    %v783 = vpop.f32.mrf.mxu0
    %v784 = vadd.f32 0.0, %v783
    %v785 = vpop.f32.mrf.mxu0
    %v786 = vadd.f32 0.0, %v785
    %787 = vdwg.mxu0
    %v790 = vrot.slane %v784, 6
    %v791 = vrot.slane %v786, 6
    %v794 = vadd.f32 %v270, %v790
    %v795 = vadd.f32 %v272, %v791
    %v796 = vtanh.pop %v794
    %v797 = vtanh.pop %v795
    %v798 = vmul.f32 %v796, 0.5
    %v799 = vadd.f32 %v798, 0.5
    %v800 = vmul.f32 %v797, 0.5
    %v801 = vadd.f32 %v800, 0.5
    %v803 = vrot.slane %v612, 7
    %v805 = vmul.f32 %v799, %v803
    %v806 = vmul.f32 %v799, %v797
    %808 = vrot.lane.b32.xlu0 %v806, 64
    %v809 = vpop.permute.xlu0 %808
    %v811 = vadd.f32 %v805, %v809
    %v812 = vtanh.pop %v811
    %v813 = vmul.f32 %v801, %v812
    %815 = vrot.lane.b32.xlu0 %v813, 64
    %v816 = vpop.permute.xlu0 %815
    %v819 = vrot.slane %v711, 6
    %v821 = vsel %vm199, %v816, %v819
    %v823 = vrot.slane %v821, 2
    %825 = vmatprep.subr.mxu0 %v417
    %826 = vmatpush1.msra.mxu0 %v416
    %827 = vmatprep.subr.mxu0 %v415
    %828 = vmatpush1.msra.mxu0 %v414
    %829 = vmatprep.subr.mxu0 %v413
    %830 = vmatpush1.msra.mxu0 %v412
    %831 = vmatprep.subr.mxu0 %v411
    %832 = vmatpush1.msra.mxu0 %v410
    %833 = vmatprep.subr.mxu0 %v409
    %834 = vmatpush1.msra.mxu0 %v408
    %835 = vmatprep.subr.mxu0 %v407
    %836 = vmatpush1.msra.mxu0 %v406
    %837 = vmatprep.subr.mxu0 %v405
    %838 = vmatpush1.msra.mxu0 %v404
    %839 = vmatprep.subr.mxu0 %v403
    %840 = vmatpush1.msra.mxu0 %v402
    %841 = vmatprep.subr.mxu0 %v401
    %842 = vmatpush1.msra.mxu0 %v400
    %843 = vmatprep.subr.mxu0 %v399
    %844 = vmatpush1.msra.mxu0 %v398
    %845 = vmatprep.subr.mxu0 %v397
    %846 = vmatpush1.msra.mxu0 %v396
    %847 = vmatprep.subr.mxu0 %v395
    %848 = vmatpush1.msra.mxu0 %v394
    %849 = vmatprep.subr.mxu0 %v393
    %850 = vmatpush1.msra.mxu0 %v392
    %851 = vmatprep.subr.mxu0 %v391
    %852 = vmatpush1.msra.mxu0 %v390
    %853 = vmatprep.subr.mxu0 %v389
    %854 = vmatpush1.msra.mxu0 %v388
    %855 = vmatprep.subr.mxu0 %v387
    %856 = vmatpush1.msra.mxu0 %v386
    %857 = vmatprep.subr.mxu0 0.0
    %858 = vmatpush2.msra.mxu0 0.0
    %859 = vmatprep.subr.mxu0 0.0
    %860 = vmatpush2.msra.mxu0 0.0
    %861 = vmatprep.subr.mxu0 0.0
    %862 = vmatpush2.msra.mxu0 0.0
    %863 = vmatprep.subr.mxu0 0.0
    %864 = vmatpush2.msra.mxu0 0.0
    %865 = vmatprep.subr.mxu0 0.0
    %866 = vmatpush2.msra.mxu0 0.0
    %867 = vmatprep.subr.mxu0 0.0
    %868 = vmatpush2.msra.mxu0 0.0
    %869 = vmatprep.subr.mxu0 0.0
    %870 = vmatpush2.msra.mxu0 0.0
    %871 = vmatprep.subr.mxu0 0.0
    %872 = vmatpush2.msra.mxu0 0.0
    %873 = vmatprep.subr.mxu0 0.0
    %874 = vmatpush2.msra.mxu0 0.0
    %875 = vmatprep.subr.mxu0 0.0
    %876 = vmatpush2.msra.mxu0 0.0
    %877 = vmatprep.subr.mxu0 0.0
    %878 = vmatpush2.msra.mxu0 0.0
    %879 = vmatprep.subr.mxu0 0.0
    %880 = vmatpush2.msra.mxu0 0.0
    %881 = vmatprep.subr.mxu0 0.0
    %882 = vmatpush2.msra.mxu0 0.0
    %883 = vmatprep.subr.mxu0 0.0
    %884 = vmatpush2.msra.mxu0 0.0
    %885 = vmatprep.subr.mxu0 0.0
    %886 = vmatpush2.msra.mxu0 0.0
    %887 = vmatprep.subr.mxu0 0.0
    %888 = vmatpush2.msra.mxu0 0.0
    %889 = vmatprep.mubr.f32.mxu0 0.0
    %890 = vmatmul.mubr.f32.gmra.mxu0 %v823
    %v891 = vpop.f32.mrf.mxu0
    %v892 = vadd.f32 %v423, %v891
    %v893 = vpop.f32.mrf.mxu0
    %v894 = vadd.f32 %v427, %v893
    %895 = vdwg.mxu0
    %v896 = vtanh.pop %v892
    %v897 = vtanh.pop %v894
    %v898 = vmul.f32 %v896, 0.5
    %v899 = vadd.f32 %v898, 0.5
    %v900 = vmul.f32 %v897, 0.5
    %v901 = vadd.f32 %v900, 0.5
    %v902 = vmul.f32 %v899, %v709
    %v903 = vmul.f32 %v899, %v897
    %905 = vrot.lane.b32.xlu0 %v903, 64
    %v906 = vpop.permute.xlu0 %905
    %v908 = vadd.f32 %v902, %v906
    %v909 = vtanh.pop %v908
    %v910 = vmul.f32 %v901, %v909
    %v911 = vrot.slane %v813, 2
    %912 = vrot.lane.b32.xlu0 %v911, 64
    %v913 = vpop.permute.xlu0 %912
    %v914 = vsel %vm199, %v913, 0
    %916 = vmatprep.subr.mxu0 0.0
    %917 = vmatpush1.msra.mxu0 0.0
    %918 = vmatprep.subr.mxu0 0.0
    %919 = vmatpush1.msra.mxu0 0.0
    %920 = vmatprep.subr.mxu0 0.0
    %921 = vmatpush1.msra.mxu0 0.0
    %922 = vmatprep.subr.mxu0 0.0
    %923 = vmatpush1.msra.mxu0 0.0
    %924 = vmatprep.subr.mxu0 0.0
    %925 = vmatpush1.msra.mxu0 0.0
    %926 = vmatprep.subr.mxu0 0.0
    %927 = vmatpush1.msra.mxu0 0.0
    %928 = vmatprep.subr.mxu0 0.0
    %929 = vmatpush1.msra.mxu0 0.0
    %930 = vmatprep.subr.mxu0 0.0
    %931 = vmatpush1.msra.mxu0 0.0
    %932 = vmatprep.subr.mxu0 %v289
    %933 = vmatpush1.msra.mxu0 %v288
    %934 = vmatprep.subr.mxu0 %v287
    %935 = vmatpush1.msra.mxu0 %v286
    %936 = vmatprep.subr.mxu0 %v285
    %937 = vmatpush1.msra.mxu0 %v284
    %938 = vmatprep.subr.mxu0 %v283
    %939 = vmatpush1.msra.mxu0 %v282
    %940 = vmatprep.subr.mxu0 %v281
    %941 = vmatpush1.msra.mxu0 %v280
    %942 = vmatprep.subr.mxu0 %v279
    %943 = vmatpush1.msra.mxu0 %v278
    %944 = vmatprep.subr.mxu0 %v277
    %945 = vmatpush1.msra.mxu0 %v276
    %946 = vmatprep.subr.mxu0 %v275
    %947 = vmatpush1.msra.mxu0 %v274
    %948 = vmatprep.subr.mxu0 0.0
    %949 = vmatpush2.msra.mxu0 0.0
    %950 = vmatprep.subr.mxu0 0.0
    %951 = vmatpush2.msra.mxu0 0.0
    %952 = vmatprep.subr.mxu0 0.0
    %953 = vmatpush2.msra.mxu0 0.0
    %954 = vmatprep.subr.mxu0 0.0
    %955 = vmatpush2.msra.mxu0 0.0
    %956 = vmatprep.subr.mxu0 0.0
    %957 = vmatpush2.msra.mxu0 0.0
    %958 = vmatprep.subr.mxu0 0.0
    %959 = vmatpush2.msra.mxu0 0.0
    %960 = vmatprep.subr.mxu0 0.0
    %961 = vmatpush2.msra.mxu0 0.0
    %962 = vmatprep.subr.mxu0 0.0
    %963 = vmatpush2.msra.mxu0 0.0
    %964 = vmatprep.subr.mxu0 0.0
    %965 = vmatpush2.msra.mxu0 0.0
    %966 = vmatprep.subr.mxu0 0.0
    %967 = vmatpush2.msra.mxu0 0.0
    %968 = vmatprep.subr.mxu0 0.0
    %969 = vmatpush2.msra.mxu0 0.0
    %970 = vmatprep.subr.mxu0 0.0
    %971 = vmatpush2.msra.mxu0 0.0
    %972 = vmatprep.subr.mxu0 0.0
    %973 = vmatpush2.msra.mxu0 0.0
    %974 = vmatprep.subr.mxu0 0.0
    %975 = vmatpush2.msra.mxu0 0.0
    %976 = vmatprep.subr.mxu0 0.0
    %977 = vmatpush2.msra.mxu0 0.0
    %978 = vmatprep.subr.mxu0 0.0
    %979 = vmatpush2.msra.mxu0 0.0
    %980 = vmatprep.mubr.f32.mxu0 0.0
    %981 = vmatmul.mubr.f32.gmra.mxu0 %v914
    %v982 = vpop.f32.mrf.mxu0
    %v983 = vadd.f32 0.0, %v982
    %v984 = vpop.f32.mrf.mxu0
    %v985 = vadd.f32 0.0, %v984
    %986 = vdwg.mxu0
    %v989 = vrot.slane %v983, 5
    %v990 = vrot.slane %v985, 5
    %v993 = vadd.f32 %v270, %v989
    %v994 = vadd.f32 %v272, %v990
    %v995 = vtanh.pop %v993
    %v996 = vtanh.pop %v994
    %v997 = vmul.f32 %v995, 0.5
    %v998 = vadd.f32 %v997, 0.5
    %v999 = vmul.f32 %v996, 0.5
    %v1000 = vadd.f32 %v999, 0.5
    %v1002 = vrot.slane %v811, 7
    %v1004 = vmul.f32 %v998, %v1002
    %v1005 = vmul.f32 %v998, %v996
    %1007 = vrot.lane.b32.xlu0 %v1005, 64
    %v1008 = vpop.permute.xlu0 %1007
    %v1010 = vadd.f32 %v1004, %v1008
    %v1011 = vtanh.pop %v1010
    %v1012 = vmul.f32 %v1000, %v1011
    %1014 = vrot.lane.b32.xlu0 %v1012, 64
    %v1015 = vpop.permute.xlu0 %1014
    %v1018 = vrot.slane %v910, 5
    %v1020 = vsel %vm199, %v1015, %v1018
    %v1022 = vrot.slane %v1020, 3
    %1024 = vmatprep.subr.mxu0 %v417
    %1025 = vmatpush1.msra.mxu0 %v416
    %1026 = vmatprep.subr.mxu0 %v415
    %1027 = vmatpush1.msra.mxu0 %v414
    %1028 = vmatprep.subr.mxu0 %v413
    %1029 = vmatpush1.msra.mxu0 %v412
    %1030 = vmatprep.subr.mxu0 %v411
    %1031 = vmatpush1.msra.mxu0 %v410
    %1032 = vmatprep.subr.mxu0 %v409
    %1033 = vmatpush1.msra.mxu0 %v408
    %1034 = vmatprep.subr.mxu0 %v407
    %1035 = vmatpush1.msra.mxu0 %v406
    %1036 = vmatprep.subr.mxu0 %v405
    %1037 = vmatpush1.msra.mxu0 %v404
    %1038 = vmatprep.subr.mxu0 %v403
    %1039 = vmatpush1.msra.mxu0 %v402
    %1040 = vmatprep.subr.mxu0 %v401
    %1041 = vmatpush1.msra.mxu0 %v400
    %1042 = vmatprep.subr.mxu0 %v399
    %1043 = vmatpush1.msra.mxu0 %v398
    %1044 = vmatprep.subr.mxu0 %v397
    %1045 = vmatpush1.msra.mxu0 %v396
    %1046 = vmatprep.subr.mxu0 %v395
    %1047 = vmatpush1.msra.mxu0 %v394
    %1048 = vmatprep.subr.mxu0 %v393
    %1049 = vmatpush1.msra.mxu0 %v392
    %1050 = vmatprep.subr.mxu0 %v391
    %1051 = vmatpush1.msra.mxu0 %v390
    %1052 = vmatprep.subr.mxu0 %v389
    %1053 = vmatpush1.msra.mxu0 %v388
    %1054 = vmatprep.subr.mxu0 %v387
    %1055 = vmatpush1.msra.mxu0 %v386
    %1056 = vmatprep.subr.mxu0 0.0
    %1057 = vmatpush2.msra.mxu0 0.0
    %1058 = vmatprep.subr.mxu0 0.0
    %1059 = vmatpush2.msra.mxu0 0.0
    %1060 = vmatprep.subr.mxu0 0.0
    %1061 = vmatpush2.msra.mxu0 0.0
    %1062 = vmatprep.subr.mxu0 0.0
    %1063 = vmatpush2.msra.mxu0 0.0
    %1064 = vmatprep.subr.mxu0 0.0
    %1065 = vmatpush2.msra.mxu0 0.0
    %1066 = vmatprep.subr.mxu0 0.0
    %1067 = vmatpush2.msra.mxu0 0.0
    %1068 = vmatprep.subr.mxu0 0.0
    %1069 = vmatpush2.msra.mxu0 0.0
    %1070 = vmatprep.subr.mxu0 0.0
    %1071 = vmatpush2.msra.mxu0 0.0
    %1072 = vmatprep.subr.mxu0 0.0
    %1073 = vmatpush2.msra.mxu0 0.0
    %1074 = vmatprep.subr.mxu0 0.0
    %1075 = vmatpush2.msra.mxu0 0.0
    %1076 = vmatprep.subr.mxu0 0.0
    %1077 = vmatpush2.msra.mxu0 0.0
    %1078 = vmatprep.subr.mxu0 0.0
    %1079 = vmatpush2.msra.mxu0 0.0
    %1080 = vmatprep.subr.mxu0 0.0
    %1081 = vmatpush2.msra.mxu0 0.0
    %1082 = vmatprep.subr.mxu0 0.0
    %1083 = vmatpush2.msra.mxu0 0.0
    %1084 = vmatprep.subr.mxu0 0.0
    %1085 = vmatpush2.msra.mxu0 0.0
    %1086 = vmatprep.subr.mxu0 0.0
    %1087 = vmatpush2.msra.mxu0 0.0
    %1088 = vmatprep.mubr.f32.mxu0 0.0
    %1089 = vmatmul.mubr.f32.gmra.mxu0 %v1022
    %v1090 = vpop.f32.mrf.mxu0
    %v1091 = vadd.f32 %v423, %v1090
    %v1092 = vpop.f32.mrf.mxu0
    %v1093 = vadd.f32 %v427, %v1092
    %1094 = vdwg.mxu0
    %v1095 = vtanh.pop %v1091
    %v1096 = vtanh.pop %v1093
    %v1097 = vmul.f32 %v1095, 0.5
    %v1098 = vadd.f32 %v1097, 0.5
    %v1099 = vmul.f32 %v1096, 0.5
    %v1100 = vadd.f32 %v1099, 0.5
    %v1101 = vmul.f32 %v1098, %v908
    %v1102 = vmul.f32 %v1098, %v1096
    %1104 = vrot.lane.b32.xlu0 %v1102, 64
    %v1105 = vpop.permute.xlu0 %1104
    %v1107 = vadd.f32 %v1101, %v1105
    %v1108 = vtanh.pop %v1107
    %v1109 = vmul.f32 %v1100, %v1108
    %v1110 = vrot.slane %v1012, 3
    %1111 = vrot.lane.b32.xlu0 %v1110, 64
    %v1112 = vpop.permute.xlu0 %1111
    %v1113 = vsel %vm199, %v1112, 0
    %1115 = vmatprep.subr.mxu0 0.0
    %1116 = vmatpush1.msra.mxu0 0.0
    %1117 = vmatprep.subr.mxu0 0.0
    %1118 = vmatpush1.msra.mxu0 0.0
    %1119 = vmatprep.subr.mxu0 0.0
    %1120 = vmatpush1.msra.mxu0 0.0
    %1121 = vmatprep.subr.mxu0 0.0
    %1122 = vmatpush1.msra.mxu0 0.0
    %1123 = vmatprep.subr.mxu0 0.0
    %1124 = vmatpush1.msra.mxu0 0.0
    %1125 = vmatprep.subr.mxu0 0.0
    %1126 = vmatpush1.msra.mxu0 0.0
    %1127 = vmatprep.subr.mxu0 0.0
    %1128 = vmatpush1.msra.mxu0 0.0
    %1129 = vmatprep.subr.mxu0 0.0
    %1130 = vmatpush1.msra.mxu0 0.0
    %1131 = vmatprep.subr.mxu0 %v289
    %1132 = vmatpush1.msra.mxu0 %v288
    %1133 = vmatprep.subr.mxu0 %v287
    %1134 = vmatpush1.msra.mxu0 %v286
    %1135 = vmatprep.subr.mxu0 %v285
    %1136 = vmatpush1.msra.mxu0 %v284
    %1137 = vmatprep.subr.mxu0 %v283
    %1138 = vmatpush1.msra.mxu0 %v282
    %1139 = vmatprep.subr.mxu0 %v281
    %1140 = vmatpush1.msra.mxu0 %v280
    %1141 = vmatprep.subr.mxu0 %v279
    %1142 = vmatpush1.msra.mxu0 %v278
    %1143 = vmatprep.subr.mxu0 %v277
    %1144 = vmatpush1.msra.mxu0 %v276
    %1145 = vmatprep.subr.mxu0 %v275
    %1146 = vmatpush1.msra.mxu0 %v274
    %1147 = vmatprep.subr.mxu0 0.0
    %1148 = vmatpush2.msra.mxu0 0.0
    %1149 = vmatprep.subr.mxu0 0.0
    %1150 = vmatpush2.msra.mxu0 0.0
    %1151 = vmatprep.subr.mxu0 0.0
    %1152 = vmatpush2.msra.mxu0 0.0
    %1153 = vmatprep.subr.mxu0 0.0
    %1154 = vmatpush2.msra.mxu0 0.0
    %1155 = vmatprep.subr.mxu0 0.0
    %1156 = vmatpush2.msra.mxu0 0.0
    %1157 = vmatprep.subr.mxu0 0.0
    %1158 = vmatpush2.msra.mxu0 0.0
    %1159 = vmatprep.subr.mxu0 0.0
    %1160 = vmatpush2.msra.mxu0 0.0
    %1161 = vmatprep.subr.mxu0 0.0
    %1162 = vmatpush2.msra.mxu0 0.0
    %1163 = vmatprep.subr.mxu0 0.0
    %1164 = vmatpush2.msra.mxu0 0.0
    %1165 = vmatprep.subr.mxu0 0.0
    %1166 = vmatpush2.msra.mxu0 0.0
    %1167 = vmatprep.subr.mxu0 0.0
    %1168 = vmatpush2.msra.mxu0 0.0
    %1169 = vmatprep.subr.mxu0 0.0
    %1170 = vmatpush2.msra.mxu0 0.0
    %1171 = vmatprep.subr.mxu0 0.0
    %1172 = vmatpush2.msra.mxu0 0.0
    %1173 = vmatprep.subr.mxu0 0.0
    %1174 = vmatpush2.msra.mxu0 0.0
    %1175 = vmatprep.subr.mxu0 0.0
    %1176 = vmatpush2.msra.mxu0 0.0
    %1177 = vmatprep.subr.mxu0 0.0
    %1178 = vmatpush2.msra.mxu0 0.0
    %1179 = vmatprep.mubr.f32.mxu0 0.0
    %1180 = vmatmul.mubr.f32.gmra.mxu0 %v1113
    %v1181 = vpop.f32.mrf.mxu0
    %v1182 = vadd.f32 0.0, %v1181
    %v1183 = vpop.f32.mrf.mxu0
    %v1184 = vadd.f32 0.0, %v1183
    %1185 = vdwg.mxu0
    %v1188 = vrot.slane %v1182, 4
    %v1189 = vrot.slane %v1184, 4
    %v1192 = vadd.f32 %v270, %v1188
    %v1193 = vadd.f32 %v272, %v1189
    %v1194 = vtanh.pop %v1192
    %v1195 = vtanh.pop %v1193
    %v1196 = vmul.f32 %v1194, 0.5
    %v1197 = vadd.f32 %v1196, 0.5
    %v1198 = vmul.f32 %v1195, 0.5
    %v1199 = vadd.f32 %v1198, 0.5
    %v1201 = vrot.slane %v1010, 7
    %v1203 = vmul.f32 %v1197, %v1201
    %v1204 = vmul.f32 %v1197, %v1195
    %1206 = vrot.lane.b32.xlu0 %v1204, 64
    %v1207 = vpop.permute.xlu0 %1206
    %v1209 = vadd.f32 %v1203, %v1207
    %v1210 = vtanh.pop %v1209
    %v1211 = vmul.f32 %v1199, %v1210
    %1213 = vrot.lane.b32.xlu0 %v1211, 64
    %v1214 = vpop.permute.xlu0 %1213
    %v1217 = vrot.slane %v1109, 4
    %v1219 = vsel %vm199, %v1214, %v1217
    %v1221 = vrot.slane %v1219, 4
    %1223 = vmatprep.subr.mxu0 %v417
    %1224 = vmatpush1.msra.mxu0 %v416
    %1225 = vmatprep.subr.mxu0 %v415
    %1226 = vmatpush1.msra.mxu0 %v414
    %1227 = vmatprep.subr.mxu0 %v413
    %1228 = vmatpush1.msra.mxu0 %v412
    %1229 = vmatprep.subr.mxu0 %v411
    %1230 = vmatpush1.msra.mxu0 %v410
    %1231 = vmatprep.subr.mxu0 %v409
    %1232 = vmatpush1.msra.mxu0 %v408
    %1233 = vmatprep.subr.mxu0 %v407
    %1234 = vmatpush1.msra.mxu0 %v406
    %1235 = vmatprep.subr.mxu0 %v405
    %1236 = vmatpush1.msra.mxu0 %v404
    %1237 = vmatprep.subr.mxu0 %v403
    %1238 = vmatpush1.msra.mxu0 %v402
    %1239 = vmatprep.subr.mxu0 %v401
    %1240 = vmatpush1.msra.mxu0 %v400
    %1241 = vmatprep.subr.mxu0 %v399
    %1242 = vmatpush1.msra.mxu0 %v398
    %1243 = vmatprep.subr.mxu0 %v397
    %1244 = vmatpush1.msra.mxu0 %v396
    %1245 = vmatprep.subr.mxu0 %v395
    %1246 = vmatpush1.msra.mxu0 %v394
    %1247 = vmatprep.subr.mxu0 %v393
    %1248 = vmatpush1.msra.mxu0 %v392
    %1249 = vmatprep.subr.mxu0 %v391
    %1250 = vmatpush1.msra.mxu0 %v390
    %1251 = vmatprep.subr.mxu0 %v389
    %1252 = vmatpush1.msra.mxu0 %v388
    %1253 = vmatprep.subr.mxu0 %v387
    %1254 = vmatpush1.msra.mxu0 %v386
    %1255 = vmatprep.subr.mxu0 0.0
    %1256 = vmatpush2.msra.mxu0 0.0
    %1257 = vmatprep.subr.mxu0 0.0
    %1258 = vmatpush2.msra.mxu0 0.0
    %1259 = vmatprep.subr.mxu0 0.0
    %1260 = vmatpush2.msra.mxu0 0.0
    %1261 = vmatprep.subr.mxu0 0.0
    %1262 = vmatpush2.msra.mxu0 0.0
    %1263 = vmatprep.subr.mxu0 0.0
    %1264 = vmatpush2.msra.mxu0 0.0
    %1265 = vmatprep.subr.mxu0 0.0
    %1266 = vmatpush2.msra.mxu0 0.0
    %1267 = vmatprep.subr.mxu0 0.0
    %1268 = vmatpush2.msra.mxu0 0.0
    %1269 = vmatprep.subr.mxu0 0.0
    %1270 = vmatpush2.msra.mxu0 0.0
    %1271 = vmatprep.subr.mxu0 0.0
    %1272 = vmatpush2.msra.mxu0 0.0
    %1273 = vmatprep.subr.mxu0 0.0
    %1274 = vmatpush2.msra.mxu0 0.0
    %1275 = vmatprep.subr.mxu0 0.0
    %1276 = vmatpush2.msra.mxu0 0.0
    %1277 = vmatprep.subr.mxu0 0.0
    %1278 = vmatpush2.msra.mxu0 0.0
    %1279 = vmatprep.subr.mxu0 0.0
    %1280 = vmatpush2.msra.mxu0 0.0
    %1281 = vmatprep.subr.mxu0 0.0
    %1282 = vmatpush2.msra.mxu0 0.0
    %1283 = vmatprep.subr.mxu0 0.0
    %1284 = vmatpush2.msra.mxu0 0.0
    %1285 = vmatprep.subr.mxu0 0.0
    %1286 = vmatpush2.msra.mxu0 0.0
    %1287 = vmatprep.mubr.f32.mxu0 0.0
    %1288 = vmatmul.mubr.f32.gmra.mxu0 %v1221
    %v1289 = vpop.f32.mrf.mxu0
    %v1290 = vadd.f32 %v423, %v1289
    %v1291 = vpop.f32.mrf.mxu0
    %v1292 = vadd.f32 %v427, %v1291
    %1293 = vdwg.mxu0
    %v1294 = vtanh.pop %v1290
    %v1295 = vtanh.pop %v1292
    %v1296 = vmul.f32 %v1294, 0.5
    %v1297 = vadd.f32 %v1296, 0.5
    %v1298 = vmul.f32 %v1295, 0.5
    %v1299 = vadd.f32 %v1298, 0.5
    %v1300 = vmul.f32 %v1297, %v1107
    %v1301 = vmul.f32 %v1297, %v1295
    %1303 = vrot.lane.b32.xlu0 %v1301, 64
    %v1304 = vpop.permute.xlu0 %1303
    %v1306 = vadd.f32 %v1300, %v1304
    %v1307 = vtanh.pop %v1306
    %v1308 = vmul.f32 %v1299, %v1307
    %v1309 = vrot.slane %v1211, 4
    %1310 = vrot.lane.b32.xlu0 %v1309, 64
    %v1311 = vpop.permute.xlu0 %1310
    %v1312 = vsel %vm199, %v1311, 0
    %1314 = vmatprep.subr.mxu0 0.0
    %1315 = vmatpush1.msra.mxu0 0.0
    %1316 = vmatprep.subr.mxu0 0.0
    %1317 = vmatpush1.msra.mxu0 0.0
    %1318 = vmatprep.subr.mxu0 0.0
    %1319 = vmatpush1.msra.mxu0 0.0
    %1320 = vmatprep.subr.mxu0 0.0
    %1321 = vmatpush1.msra.mxu0 0.0
    %1322 = vmatprep.subr.mxu0 0.0
    %1323 = vmatpush1.msra.mxu0 0.0
    %1324 = vmatprep.subr.mxu0 0.0
    %1325 = vmatpush1.msra.mxu0 0.0
    %1326 = vmatprep.subr.mxu0 0.0
    %1327 = vmatpush1.msra.mxu0 0.0
    %1328 = vmatprep.subr.mxu0 0.0
    %1329 = vmatpush1.msra.mxu0 0.0
    %1330 = vmatprep.subr.mxu0 %v289
    %1331 = vmatpush1.msra.mxu0 %v288
    %1332 = vmatprep.subr.mxu0 %v287
    %1333 = vmatpush1.msra.mxu0 %v286
    %1334 = vmatprep.subr.mxu0 %v285
    %1335 = vmatpush1.msra.mxu0 %v284
    %1336 = vmatprep.subr.mxu0 %v283
    %1337 = vmatpush1.msra.mxu0 %v282
    %1338 = vmatprep.subr.mxu0 %v281
    %1339 = vmatpush1.msra.mxu0 %v280
    %1340 = vmatprep.subr.mxu0 %v279
    %1341 = vmatpush1.msra.mxu0 %v278
    %1342 = vmatprep.subr.mxu0 %v277
    %1343 = vmatpush1.msra.mxu0 %v276
    %1344 = vmatprep.subr.mxu0 %v275
    %1345 = vmatpush1.msra.mxu0 %v274
    %1346 = vmatprep.subr.mxu0 0.0
    %1347 = vmatpush2.msra.mxu0 0.0
    %1348 = vmatprep.subr.mxu0 0.0
    %1349 = vmatpush2.msra.mxu0 0.0
    %1350 = vmatprep.subr.mxu0 0.0
    %1351 = vmatpush2.msra.mxu0 0.0
    %1352 = vmatprep.subr.mxu0 0.0
    %1353 = vmatpush2.msra.mxu0 0.0
    %1354 = vmatprep.subr.mxu0 0.0
    %1355 = vmatpush2.msra.mxu0 0.0
    %1356 = vmatprep.subr.mxu0 0.0
    %1357 = vmatpush2.msra.mxu0 0.0
    %1358 = vmatprep.subr.mxu0 0.0
    %1359 = vmatpush2.msra.mxu0 0.0
    %1360 = vmatprep.subr.mxu0 0.0
    %1361 = vmatpush2.msra.mxu0 0.0
    %1362 = vmatprep.subr.mxu0 0.0
    %1363 = vmatpush2.msra.mxu0 0.0
    %1364 = vmatprep.subr.mxu0 0.0
    %1365 = vmatpush2.msra.mxu0 0.0
    %1366 = vmatprep.subr.mxu0 0.0
    %1367 = vmatpush2.msra.mxu0 0.0
    %1368 = vmatprep.subr.mxu0 0.0
    %1369 = vmatpush2.msra.mxu0 0.0
    %1370 = vmatprep.subr.mxu0 0.0
    %1371 = vmatpush2.msra.mxu0 0.0
    %1372 = vmatprep.subr.mxu0 0.0
    %1373 = vmatpush2.msra.mxu0 0.0
    %1374 = vmatprep.subr.mxu0 0.0
    %1375 = vmatpush2.msra.mxu0 0.0
    %1376 = vmatprep.subr.mxu0 0.0
    %1377 = vmatpush2.msra.mxu0 0.0
    %1378 = vmatprep.mubr.f32.mxu0 0.0
    %1379 = vmatmul.mubr.f32.gmra.mxu0 %v1312
    %v1380 = vpop.f32.mrf.mxu0
    %v1381 = vadd.f32 0.0, %v1380
    %v1382 = vpop.f32.mrf.mxu0
    %v1383 = vadd.f32 0.0, %v1382
    %1384 = vdwg.mxu0
    %v1387 = vrot.slane %v1381, 3
    %v1388 = vrot.slane %v1383, 3
    %v1391 = vadd.f32 %v270, %v1387
    %v1392 = vadd.f32 %v272, %v1388
    %v1393 = vtanh.pop %v1391
    %v1394 = vtanh.pop %v1392
    %v1395 = vmul.f32 %v1393, 0.5
    %v1396 = vadd.f32 %v1395, 0.5
    %v1397 = vmul.f32 %v1394, 0.5
    %v1398 = vadd.f32 %v1397, 0.5
    %v1400 = vrot.slane %v1209, 7
    %v1402 = vmul.f32 %v1396, %v1400
    %v1403 = vmul.f32 %v1396, %v1394
    %1405 = vrot.lane.b32.xlu0 %v1403, 64
    %v1406 = vpop.permute.xlu0 %1405
    %v1408 = vadd.f32 %v1402, %v1406
    %v1409 = vtanh.pop %v1408
    %v1410 = vmul.f32 %v1398, %v1409
    %1412 = vrot.lane.b32.xlu0 %v1410, 64
    %v1413 = vpop.permute.xlu0 %1412
    %v1416 = vrot.slane %v1308, 3
    %v1418 = vsel %vm199, %v1413, %v1416
    %v1420 = vrot.slane %v1418, 5
    %1422 = vmatprep.subr.mxu0 %v417
    %1423 = vmatpush1.msra.mxu0 %v416
    %1424 = vmatprep.subr.mxu0 %v415
    %1425 = vmatpush1.msra.mxu0 %v414
    %1426 = vmatprep.subr.mxu0 %v413
    %1427 = vmatpush1.msra.mxu0 %v412
    %1428 = vmatprep.subr.mxu0 %v411
    %1429 = vmatpush1.msra.mxu0 %v410
    %1430 = vmatprep.subr.mxu0 %v409
    %1431 = vmatpush1.msra.mxu0 %v408
    %1432 = vmatprep.subr.mxu0 %v407
    %1433 = vmatpush1.msra.mxu0 %v406
    %1434 = vmatprep.subr.mxu0 %v405
    %1435 = vmatpush1.msra.mxu0 %v404
    %1436 = vmatprep.subr.mxu0 %v403
    %1437 = vmatpush1.msra.mxu0 %v402
    %1438 = vmatprep.subr.mxu0 %v401
    %1439 = vmatpush1.msra.mxu0 %v400
    %1440 = vmatprep.subr.mxu0 %v399
    %1441 = vmatpush1.msra.mxu0 %v398
    %1442 = vmatprep.subr.mxu0 %v397
    %1443 = vmatpush1.msra.mxu0 %v396
    %1444 = vmatprep.subr.mxu0 %v395
    %1445 = vmatpush1.msra.mxu0 %v394
    %1446 = vmatprep.subr.mxu0 %v393
    %1447 = vmatpush1.msra.mxu0 %v392
    %1448 = vmatprep.subr.mxu0 %v391
    %1449 = vmatpush1.msra.mxu0 %v390
    %1450 = vmatprep.subr.mxu0 %v389
    %1451 = vmatpush1.msra.mxu0 %v388
    %1452 = vmatprep.subr.mxu0 %v387
    %1453 = vmatpush1.msra.mxu0 %v386
    %1454 = vmatprep.subr.mxu0 0.0
    %1455 = vmatpush2.msra.mxu0 0.0
    %1456 = vmatprep.subr.mxu0 0.0
    %1457 = vmatpush2.msra.mxu0 0.0
    %1458 = vmatprep.subr.mxu0 0.0
    %1459 = vmatpush2.msra.mxu0 0.0
    %1460 = vmatprep.subr.mxu0 0.0
    %1461 = vmatpush2.msra.mxu0 0.0
    %1462 = vmatprep.subr.mxu0 0.0
    %1463 = vmatpush2.msra.mxu0 0.0
    %1464 = vmatprep.subr.mxu0 0.0
    %1465 = vmatpush2.msra.mxu0 0.0
    %1466 = vmatprep.subr.mxu0 0.0
    %1467 = vmatpush2.msra.mxu0 0.0
    %1468 = vmatprep.subr.mxu0 0.0
    %1469 = vmatpush2.msra.mxu0 0.0
    %1470 = vmatprep.subr.mxu0 0.0
    %1471 = vmatpush2.msra.mxu0 0.0
    %1472 = vmatprep.subr.mxu0 0.0
    %1473 = vmatpush2.msra.mxu0 0.0
    %1474 = vmatprep.subr.mxu0 0.0
    %1475 = vmatpush2.msra.mxu0 0.0
    %1476 = vmatprep.subr.mxu0 0.0
    %1477 = vmatpush2.msra.mxu0 0.0
    %1478 = vmatprep.subr.mxu0 0.0
    %1479 = vmatpush2.msra.mxu0 0.0
    %1480 = vmatprep.subr.mxu0 0.0
    %1481 = vmatpush2.msra.mxu0 0.0
    %1482 = vmatprep.subr.mxu0 0.0
    %1483 = vmatpush2.msra.mxu0 0.0
    %1484 = vmatprep.subr.mxu0 0.0
    %1485 = vmatpush2.msra.mxu0 0.0
    %1486 = vmatprep.mubr.f32.mxu0 0.0
    %1487 = vmatmul.mubr.f32.gmra.mxu0 %v1420
    %v1488 = vpop.f32.mrf.mxu0
    %v1489 = vadd.f32 %v423, %v1488
    %v1490 = vpop.f32.mrf.mxu0
    %v1491 = vadd.f32 %v427, %v1490
    %1492 = vdwg.mxu0
    %v1493 = vtanh.pop %v1489
    %v1494 = vtanh.pop %v1491
    %v1495 = vmul.f32 %v1493, 0.5
    %v1496 = vadd.f32 %v1495, 0.5
    %v1497 = vmul.f32 %v1494, 0.5
    %v1498 = vadd.f32 %v1497, 0.5
    %v1499 = vmul.f32 %v1496, %v1306
    %v1500 = vmul.f32 %v1496, %v1494
    %1502 = vrot.lane.b32.xlu0 %v1500, 64
    %v1503 = vpop.permute.xlu0 %1502
    %v1505 = vadd.f32 %v1499, %v1503
    %v1506 = vtanh.pop %v1505
    %v1507 = vmul.f32 %v1498, %v1506
    %v1508 = vrot.slane %v1410, 5
    %1509 = vrot.lane.b32.xlu0 %v1508, 64
    %v1510 = vpop.permute.xlu0 %1509
    %v1511 = vsel %vm199, %v1510, 0
    %1513 = vmatprep.subr.mxu0 0.0
    %1514 = vmatpush1.msra.mxu0 0.0
    %1515 = vmatprep.subr.mxu0 0.0
    %1516 = vmatpush1.msra.mxu0 0.0
    %1517 = vmatprep.subr.mxu0 0.0
    %1518 = vmatpush1.msra.mxu0 0.0
    %1519 = vmatprep.subr.mxu0 0.0
    %1520 = vmatpush1.msra.mxu0 0.0
    %1521 = vmatprep.subr.mxu0 0.0
    %1522 = vmatpush1.msra.mxu0 0.0
    %1523 = vmatprep.subr.mxu0 0.0
    %1524 = vmatpush1.msra.mxu0 0.0
    %1525 = vmatprep.subr.mxu0 0.0
    %1526 = vmatpush1.msra.mxu0 0.0
    %1527 = vmatprep.subr.mxu0 0.0
    %1528 = vmatpush1.msra.mxu0 0.0
    %1529 = vmatprep.subr.mxu0 %v289
    %1530 = vmatpush1.msra.mxu0 %v288
    %1531 = vmatprep.subr.mxu0 %v287
    %1532 = vmatpush1.msra.mxu0 %v286
    %1533 = vmatprep.subr.mxu0 %v285
    %1534 = vmatpush1.msra.mxu0 %v284
    %1535 = vmatprep.subr.mxu0 %v283
    %1536 = vmatpush1.msra.mxu0 %v282
    %1537 = vmatprep.subr.mxu0 %v281
    %1538 = vmatpush1.msra.mxu0 %v280
    %1539 = vmatprep.subr.mxu0 %v279
    %1540 = vmatpush1.msra.mxu0 %v278
    %1541 = vmatprep.subr.mxu0 %v277
    %1542 = vmatpush1.msra.mxu0 %v276
    %1543 = vmatprep.subr.mxu0 %v275
    %1544 = vmatpush1.msra.mxu0 %v274
    %1545 = vmatprep.subr.mxu0 0.0
    %1546 = vmatpush2.msra.mxu0 0.0
    %1547 = vmatprep.subr.mxu0 0.0
    %1548 = vmatpush2.msra.mxu0 0.0
    %1549 = vmatprep.subr.mxu0 0.0
    %1550 = vmatpush2.msra.mxu0 0.0
    %1551 = vmatprep.subr.mxu0 0.0
    %1552 = vmatpush2.msra.mxu0 0.0
    %1553 = vmatprep.subr.mxu0 0.0
    %1554 = vmatpush2.msra.mxu0 0.0
    %1555 = vmatprep.subr.mxu0 0.0
    %1556 = vmatpush2.msra.mxu0 0.0
    %1557 = vmatprep.subr.mxu0 0.0
    %1558 = vmatpush2.msra.mxu0 0.0
    %1559 = vmatprep.subr.mxu0 0.0
    %1560 = vmatpush2.msra.mxu0 0.0
    %1561 = vmatprep.subr.mxu0 0.0
    %1562 = vmatpush2.msra.mxu0 0.0
    %1563 = vmatprep.subr.mxu0 0.0
    %1564 = vmatpush2.msra.mxu0 0.0
    %1565 = vmatprep.subr.mxu0 0.0
    %1566 = vmatpush2.msra.mxu0 0.0
    %1567 = vmatprep.subr.mxu0 0.0
    %1568 = vmatpush2.msra.mxu0 0.0
    %1569 = vmatprep.subr.mxu0 0.0
    %1570 = vmatpush2.msra.mxu0 0.0
    %1571 = vmatprep.subr.mxu0 0.0
    %1572 = vmatpush2.msra.mxu0 0.0
    %1573 = vmatprep.subr.mxu0 0.0
    %1574 = vmatpush2.msra.mxu0 0.0
    %1575 = vmatprep.subr.mxu0 0.0
    %1576 = vmatpush2.msra.mxu0 0.0
    %1577 = vmatprep.mubr.f32.mxu0 0.0
    %1578 = vmatmul.mubr.f32.gmra.mxu0 %v1511
    %v1579 = vpop.f32.mrf.mxu0
    %v1580 = vadd.f32 0.0, %v1579
    %v1581 = vpop.f32.mrf.mxu0
    %v1582 = vadd.f32 0.0, %v1581
    %1583 = vdwg.mxu0
    %v1586 = vrot.slane %v1580, 2
    %v1587 = vrot.slane %v1582, 2
    %v1590 = vadd.f32 %v270, %v1586
    %v1591 = vadd.f32 %v272, %v1587
    %v1592 = vtanh.pop %v1590
    %v1593 = vtanh.pop %v1591
    %v1594 = vmul.f32 %v1592, 0.5
    %v1595 = vadd.f32 %v1594, 0.5
    %v1596 = vmul.f32 %v1593, 0.5
    %v1597 = vadd.f32 %v1596, 0.5
    %v1599 = vrot.slane %v1408, 7
    %v1601 = vmul.f32 %v1595, %v1599
    %v1602 = vmul.f32 %v1595, %v1593
    %1604 = vrot.lane.b32.xlu0 %v1602, 64
    %v1605 = vpop.permute.xlu0 %1604
    %v1607 = vadd.f32 %v1601, %v1605
    %v1608 = vtanh.pop %v1607
    %v1609 = vmul.f32 %v1597, %v1608
    %1611 = vrot.lane.b32.xlu0 %v1609, 64
    %v1612 = vpop.permute.xlu0 %1611
    %v1615 = vrot.slane %v1507, 2
    %v1617 = vsel %vm199, %v1612, %v1615
    %v1619 = vrot.slane %v1617, 6
    %1621 = vmatprep.subr.mxu0 %v417
    %1622 = vmatpush1.msra.mxu0 %v416
    %1623 = vmatprep.subr.mxu0 %v415
    %1624 = vmatpush1.msra.mxu0 %v414
    %1625 = vmatprep.subr.mxu0 %v413
    %1626 = vmatpush1.msra.mxu0 %v412
    %1627 = vmatprep.subr.mxu0 %v411
    %1628 = vmatpush1.msra.mxu0 %v410
    %1629 = vmatprep.subr.mxu0 %v409
    %1630 = vmatpush1.msra.mxu0 %v408
    %1631 = vmatprep.subr.mxu0 %v407
    %1632 = vmatpush1.msra.mxu0 %v406
    %1633 = vmatprep.subr.mxu0 %v405
    %1634 = vmatpush1.msra.mxu0 %v404
    %1635 = vmatprep.subr.mxu0 %v403
    %1636 = vmatpush1.msra.mxu0 %v402
    %1637 = vmatprep.subr.mxu0 %v401
    %1638 = vmatpush1.msra.mxu0 %v400
    %1639 = vmatprep.subr.mxu0 %v399
    %1640 = vmatpush1.msra.mxu0 %v398
    %1641 = vmatprep.subr.mxu0 %v397
    %1642 = vmatpush1.msra.mxu0 %v396
    %1643 = vmatprep.subr.mxu0 %v395
    %1644 = vmatpush1.msra.mxu0 %v394
    %1645 = vmatprep.subr.mxu0 %v393
    %1646 = vmatpush1.msra.mxu0 %v392
    %1647 = vmatprep.subr.mxu0 %v391
    %1648 = vmatpush1.msra.mxu0 %v390
    %1649 = vmatprep.subr.mxu0 %v389
    %1650 = vmatpush1.msra.mxu0 %v388
    %1651 = vmatprep.subr.mxu0 %v387
    %1652 = vmatpush1.msra.mxu0 %v386
    %1653 = vmatprep.subr.mxu0 0.0
    %1654 = vmatpush2.msra.mxu0 0.0
    %1655 = vmatprep.subr.mxu0 0.0
    %1656 = vmatpush2.msra.mxu0 0.0
    %1657 = vmatprep.subr.mxu0 0.0
    %1658 = vmatpush2.msra.mxu0 0.0
    %1659 = vmatprep.subr.mxu0 0.0
    %1660 = vmatpush2.msra.mxu0 0.0
    %1661 = vmatprep.subr.mxu0 0.0
    %1662 = vmatpush2.msra.mxu0 0.0
    %1663 = vmatprep.subr.mxu0 0.0
    %1664 = vmatpush2.msra.mxu0 0.0
    %1665 = vmatprep.subr.mxu0 0.0
    %1666 = vmatpush2.msra.mxu0 0.0
    %1667 = vmatprep.subr.mxu0 0.0
    %1668 = vmatpush2.msra.mxu0 0.0
    %1669 = vmatprep.subr.mxu0 0.0
    %1670 = vmatpush2.msra.mxu0 0.0
    %1671 = vmatprep.subr.mxu0 0.0
    %1672 = vmatpush2.msra.mxu0 0.0
    %1673 = vmatprep.subr.mxu0 0.0
    %1674 = vmatpush2.msra.mxu0 0.0
    %1675 = vmatprep.subr.mxu0 0.0
    %1676 = vmatpush2.msra.mxu0 0.0
    %1677 = vmatprep.subr.mxu0 0.0
    %1678 = vmatpush2.msra.mxu0 0.0
    %1679 = vmatprep.subr.mxu0 0.0
    %1680 = vmatpush2.msra.mxu0 0.0
    %1681 = vmatprep.subr.mxu0 0.0
    %1682 = vmatpush2.msra.mxu0 0.0
    %1683 = vmatprep.subr.mxu0 0.0
    %1684 = vmatpush2.msra.mxu0 0.0
    %1685 = vmatprep.mubr.f32.mxu0 0.0
    %1686 = vmatmul.mubr.f32.gmra.mxu0 %v1619
    %v1687 = vpop.f32.mrf.mxu0
    %v1688 = vadd.f32 %v423, %v1687
    %v1689 = vpop.f32.mrf.mxu0
    %v1690 = vadd.f32 %v427, %v1689
    %1691 = vdwg.mxu0
    %v1692 = vtanh.pop %v1688
    %v1693 = vtanh.pop %v1690
    %v1694 = vmul.f32 %v1692, 0.5
    %v1695 = vadd.f32 %v1694, 0.5
    %v1696 = vmul.f32 %v1693, 0.5
    %v1697 = vadd.f32 %v1696, 0.5
    %v1698 = vmul.f32 %v1695, %v1505
    %v1699 = vmul.f32 %v1695, %v1693
    %1701 = vrot.lane.b32.xlu0 %v1699, 64
    %v1702 = vpop.permute.xlu0 %1701
    %v1704 = vadd.f32 %v1698, %v1702
    %v1705 = vtanh.pop %v1704
    %v1706 = vmul.f32 %v1697, %v1705
    %v1707 = vrot.slane %v1609, 6
    %1708 = vrot.lane.b32.xlu0 %v1707, 64
    %v1709 = vpop.permute.xlu0 %1708
    %v1710 = vsel %vm199, %v1709, 0
    %1712 = vmatprep.subr.mxu0 0.0
    %1713 = vmatpush1.msra.mxu0 0.0
    %1714 = vmatprep.subr.mxu0 0.0
    %1715 = vmatpush1.msra.mxu0 0.0
    %1716 = vmatprep.subr.mxu0 0.0
    %1717 = vmatpush1.msra.mxu0 0.0
    %1718 = vmatprep.subr.mxu0 0.0
    %1719 = vmatpush1.msra.mxu0 0.0
    %1720 = vmatprep.subr.mxu0 0.0
    %1721 = vmatpush1.msra.mxu0 0.0
    %1722 = vmatprep.subr.mxu0 0.0
    %1723 = vmatpush1.msra.mxu0 0.0
    %1724 = vmatprep.subr.mxu0 0.0
    %1725 = vmatpush1.msra.mxu0 0.0
    %1726 = vmatprep.subr.mxu0 0.0
    %1727 = vmatpush1.msra.mxu0 0.0
    %1728 = vmatprep.subr.mxu0 %v289
    %1729 = vmatpush1.msra.mxu0 %v288
    %1730 = vmatprep.subr.mxu0 %v287
    %1731 = vmatpush1.msra.mxu0 %v286
    %1732 = vmatprep.subr.mxu0 %v285
    %1733 = vmatpush1.msra.mxu0 %v284
    %1734 = vmatprep.subr.mxu0 %v283
    %1735 = vmatpush1.msra.mxu0 %v282
    %1736 = vmatprep.subr.mxu0 %v281
    %1737 = vmatpush1.msra.mxu0 %v280
    %1738 = vmatprep.subr.mxu0 %v279
    %1739 = vmatpush1.msra.mxu0 %v278
    %1740 = vmatprep.subr.mxu0 %v277
    %1741 = vmatpush1.msra.mxu0 %v276
    %1742 = vmatprep.subr.mxu0 %v275
    %1743 = vmatpush1.msra.mxu0 %v274
    %1744 = vmatprep.subr.mxu0 0.0
    %1745 = vmatpush2.msra.mxu0 0.0
    %1746 = vmatprep.subr.mxu0 0.0
    %1747 = vmatpush2.msra.mxu0 0.0
    %1748 = vmatprep.subr.mxu0 0.0
    %1749 = vmatpush2.msra.mxu0 0.0
    %1750 = vmatprep.subr.mxu0 0.0
    %1751 = vmatpush2.msra.mxu0 0.0
    %1752 = vmatprep.subr.mxu0 0.0
    %1753 = vmatpush2.msra.mxu0 0.0
    %1754 = vmatprep.subr.mxu0 0.0
    %1755 = vmatpush2.msra.mxu0 0.0
    %1756 = vmatprep.subr.mxu0 0.0
    %1757 = vmatpush2.msra.mxu0 0.0
    %1758 = vmatprep.subr.mxu0 0.0
    %1759 = vmatpush2.msra.mxu0 0.0
    %1760 = vmatprep.subr.mxu0 0.0
    %1761 = vmatpush2.msra.mxu0 0.0
    %1762 = vmatprep.subr.mxu0 0.0
    %1763 = vmatpush2.msra.mxu0 0.0
    %1764 = vmatprep.subr.mxu0 0.0
    %1765 = vmatpush2.msra.mxu0 0.0
    %1766 = vmatprep.subr.mxu0 0.0
    %1767 = vmatpush2.msra.mxu0 0.0
    %1768 = vmatprep.subr.mxu0 0.0
    %1769 = vmatpush2.msra.mxu0 0.0
    %1770 = vmatprep.subr.mxu0 0.0
    %1771 = vmatpush2.msra.mxu0 0.0
    %1772 = vmatprep.subr.mxu0 0.0
    %1773 = vmatpush2.msra.mxu0 0.0
    %1774 = vmatprep.subr.mxu0 0.0
    %1775 = vmatpush2.msra.mxu0 0.0
    %1776 = vmatprep.mubr.f32.mxu0 0.0
    %1777 = vmatmul.mubr.f32.gmra.mxu0 %v1710
    %v1778 = vpop.f32.mrf.mxu0
    %v1779 = vadd.f32 0.0, %v1778
    %v1780 = vpop.f32.mrf.mxu0
    %v1781 = vadd.f32 0.0, %v1780
    %1782 = vdwg.mxu0
    %v1785 = vrot.slane %v1779, 1
    %v1786 = vrot.slane %v1781, 1
    %v1789 = vadd.f32 %v270, %v1785
    %v1790 = vadd.f32 %v272, %v1786
    %v1791 = vtanh.pop %v1789
    %v1792 = vtanh.pop %v1790
    %v1793 = vmul.f32 %v1791, 0.5
    %v1794 = vadd.f32 %v1793, 0.5
    %v1795 = vmul.f32 %v1792, 0.5
    %v1796 = vadd.f32 %v1795, 0.5
    %v1798 = vrot.slane %v1607, 7
    %v1800 = vmul.f32 %v1794, %v1798
    %v1801 = vmul.f32 %v1794, %v1792
    %1803 = vrot.lane.b32.xlu0 %v1801, 64
    %v1804 = vpop.permute.xlu0 %1803
    %v1806 = vadd.f32 %v1800, %v1804
    %v1807 = vtanh.pop %v1806
    %v1808 = vmul.f32 %v1796, %v1807
    %1810 = vrot.lane.b32.xlu0 %v1808, 64
    %v1811 = vpop.permute.xlu0 %1810
    %v1814 = vrot.slane %v1706, 1
    %v1816 = vsel %vm199, %v1811, %v1814
    %v1818 = vrot.slane %v1816, 7
    %1820 = vmatprep.subr.mxu0 %v417
    %1821 = vmatpush1.msra.mxu0 %v416
    %1822 = vmatprep.subr.mxu0 %v415
    %1823 = vmatpush1.msra.mxu0 %v414
    %1824 = vmatprep.subr.mxu0 %v413
    %1825 = vmatpush1.msra.mxu0 %v412
    %1826 = vmatprep.subr.mxu0 %v411
    %1827 = vmatpush1.msra.mxu0 %v410
    %1828 = vmatprep.subr.mxu0 %v409
    %1829 = vmatpush1.msra.mxu0 %v408
    %1830 = vmatprep.subr.mxu0 %v407
    %1831 = vmatpush1.msra.mxu0 %v406
    %1832 = vmatprep.subr.mxu0 %v405
    %1833 = vmatpush1.msra.mxu0 %v404
    %1834 = vmatprep.subr.mxu0 %v403
    %1835 = vmatpush1.msra.mxu0 %v402
    %1836 = vmatprep.subr.mxu0 %v401
    %1837 = vmatpush1.msra.mxu0 %v400
    %1838 = vmatprep.subr.mxu0 %v399
    %1839 = vmatpush1.msra.mxu0 %v398
    %1840 = vmatprep.subr.mxu0 %v397
    %1841 = vmatpush1.msra.mxu0 %v396
    %1842 = vmatprep.subr.mxu0 %v395
    %1843 = vmatpush1.msra.mxu0 %v394
    %1844 = vmatprep.subr.mxu0 %v393
    %1845 = vmatpush1.msra.mxu0 %v392
    %1846 = vmatprep.subr.mxu0 %v391
    %1847 = vmatpush1.msra.mxu0 %v390
    %1848 = vmatprep.subr.mxu0 %v389
    %1849 = vmatpush1.msra.mxu0 %v388
    %1850 = vmatprep.subr.mxu0 %v387
    %1851 = vmatpush1.msra.mxu0 %v386
    %1852 = vmatprep.subr.mxu0 0.0
    %1853 = vmatpush2.msra.mxu0 0.0
    %1854 = vmatprep.subr.mxu0 0.0
    %1855 = vmatpush2.msra.mxu0 0.0
    %1856 = vmatprep.subr.mxu0 0.0
    %1857 = vmatpush2.msra.mxu0 0.0
    %1858 = vmatprep.subr.mxu0 0.0
    %1859 = vmatpush2.msra.mxu0 0.0
    %1860 = vmatprep.subr.mxu0 0.0
    %1861 = vmatpush2.msra.mxu0 0.0
    %1862 = vmatprep.subr.mxu0 0.0
    %1863 = vmatpush2.msra.mxu0 0.0
    %1864 = vmatprep.subr.mxu0 0.0
    %1865 = vmatpush2.msra.mxu0 0.0
    %1866 = vmatprep.subr.mxu0 0.0
    %1867 = vmatpush2.msra.mxu0 0.0
    %1868 = vmatprep.subr.mxu0 0.0
    %1869 = vmatpush2.msra.mxu0 0.0
    %1870 = vmatprep.subr.mxu0 0.0
    %1871 = vmatpush2.msra.mxu0 0.0
    %1872 = vmatprep.subr.mxu0 0.0
    %1873 = vmatpush2.msra.mxu0 0.0
    %1874 = vmatprep.subr.mxu0 0.0
    %1875 = vmatpush2.msra.mxu0 0.0
    %1876 = vmatprep.subr.mxu0 0.0
    %1877 = vmatpush2.msra.mxu0 0.0
    %1878 = vmatprep.subr.mxu0 0.0
    %1879 = vmatpush2.msra.mxu0 0.0
    %1880 = vmatprep.subr.mxu0 0.0
    %1881 = vmatpush2.msra.mxu0 0.0
    %1882 = vmatprep.subr.mxu0 0.0
    %1883 = vmatpush2.msra.mxu0 0.0
    %1884 = vmatprep.mubr.f32.mxu0 0.0
    %1885 = vmatmul.mubr.f32.gmra.mxu0 %v1818
    %v1886 = vpop.f32.mrf.mxu0
    %v1887 = vadd.f32 %v423, %v1886
    %v1888 = vpop.f32.mrf.mxu0
    %v1889 = vadd.f32 %v427, %v1888
    %1890 = vdwg.mxu0
    %v1891 = vtanh.pop %v1887
    %v1892 = vtanh.pop %v1889
    %v1893 = vmul.f32 %v1891, 0.5
    %v1894 = vadd.f32 %v1893, 0.5
    %v1895 = vmul.f32 %v1892, 0.5
    %v1896 = vadd.f32 %v1895, 0.5
    %v1897 = vmul.f32 %v1894, %v1704
    %v1898 = vmul.f32 %v1894, %v1892
    %1900 = vrot.lane.b32.xlu0 %v1898, 64
    %v1901 = vpop.permute.xlu0 %1900
    %v1903 = vadd.f32 %v1897, %v1901
    %v1904 = vtanh.pop %v1903
    %v1905 = vmul.f32 %v1896, %v1904
    %v1906 = vrot.slane %v711, 7
    %v1908 = vrot.slane %v910, 6
    %v1910 = vrot.slane %v1109, 5
    %v1912 = vrot.slane %v1308, 4
    %v1914 = vrot.slane %v1507, 3
    %v1916 = vrot.slane %v1706, 2
    %v1919 = vrot.slane %v1905, 1
    %vm1921 = vcmask 1040384
    %v1922 = vsel %vm1921, %v515, %v1906
    %vm1923 = vcmask 1041408
    %v1924 = vsel %vm1923, %v1922, %v1908
    %vm1925 = vcmask 1042432
    %v1926 = vsel %vm1925, %v1924, %v1910
    %vm1927 = vcmask 1043456
    %v1928 = vsel %vm1927, %v1926, %v1912
    %vm1929 = vcmask 1044480
    %v1930 = vsel %vm1929, %v1928, %v1914
    %vm1931 = vcmask 1045504
    %v1932 = vsel %vm1931, %v1930, %v1916
    %vm1933 = vcmask 1046528
    %v1934 = vsel %vm1933, %v1932, %v1919
    %1936 = vrot.lane.b32.xlu0 %v1934, 64
    %v1937 = vpop.permute.xlu0 %1936
    %1939 = vst.msk [vmem:[%s8] sm:$0xff] %vm199, %v1937
    // Predicated region
    $region50: #{dynamics_forward.1} parent=1 // pred_check
      _
    $region51: #{dynamics_forward.1} parent=1 // pred_check_branch
      %1941 = sbr.rel (0) target = $region53
    $region52: #{dynamics_forward.1} parent=1 // pred_region
      _
    $region53: #{dynamics_forward.1} parent=1 // pred_fallthru
      _
    // Predicated region
    $region54: #{dynamics_forward.1} parent=1 // pred_check
      _
    $region55: #{dynamics_forward.1} parent=1 // pred_check_branch
      %1943 = sbr.rel (0) target = $region57
    $region56: #{dynamics_forward.1} parent=1 // pred_region
      _
    $region57: #{dynamics_forward.1} parent=1 // pred_fallthru
      _
    %1944 = vsyncpa [#allocation3], 1
    %1945 = vsyncpa [#allocation5], 1
    %1946 = vsyncpa [#allocation8], 1

</llo_original>
